<compile_context>
chip_gen: v5e
topology: v5e:2x2
jax: 0.10.0
libtpu: 0.0.40
codegen_flags: <defaults>
</compile_context>

<pallas_src>
import functools

import jax
import jax.numpy as jnp
from jax.experimental import pallas as pl
from jax.experimental.pallas import tpu as pltpu

EXPANSION = 4
BN_EPS = 1e-5
LANE = 128                      # channel padding quantum (TPU lane width)


# ----------------------------------------------------------------------------
# small helpers
# ----------------------------------------------------------------------------
def _round_up(x, m):
    return ((x + m - 1) // m) * m


def _cdiv(a, b):
    return -(-a // b)


def _pick_tile(dim, target, quantum):
    """Largest divisor of `dim` that is <= target and a multiple of quantum."""
    t = (min(target, dim) // quantum) * quantum
    while t >= quantum:
        if dim % t == 0:
            return t
        t -= quantum
    return dim


def _vmem_budget():
    """Generation-aware VMEM budget: 3/4 of physical, capped at 112 MiB.

    -> ~48 MiB on v7x (64 MiB physical), ~96 MiB on v5e/v6e (128 MiB)."""
    cap = 64 * 1024 * 1024
    try:
        info = pltpu.get_tpu_info()
        cap = int(getattr(info, "vmem_capacity_bytes", cap))
    except Exception:
        pass
    return int(min(cap * 3 // 4, 112 * 1024 * 1024))


def _pad_last(a, target):
    pad = target - a.shape[-1]
    if pad == 0:
        return a
    cfg = [(0, 0)] * (a.ndim - 1) + [(0, pad)]
    return jnp.pad(a, cfg)


def _pad_w2d(w, rows, cols):
    return jnp.pad(w, ((0, rows - w.shape[0]), (0, cols - w.shape[1])))


def _fold_bn(gamma, beta, mean, var, c_pad):
    scale = gamma / jnp.sqrt(var + BN_EPS)
    bias = beta - mean * scale
    return _pad_last(scale, c_pad), _pad_last(bias, c_pad)


# ----------------------------------------------------------------------------
# Pallas kernels
# ----------------------------------------------------------------------------
def _conv1x1_bn_kernel(x_ref, w_ref, s_ref, b_ref, o_ref, *, relu):
    """1x1 conv tile: (tm, cin)bf16 x (cin, cout)bf16 -> f32 acc; fused BN."""
    acc = jnp.dot(x_ref[...], w_ref[...], preferred_element_type=jnp.float32)
    out = acc * s_ref[...] + b_ref[...]
    if relu:
        out = jnp.maximum(out, 0.0)
    o_ref[...] = out.astype(o_ref.dtype)


def _conv1x1_bn_res_kernel(x_ref, w_ref, s_ref, b_ref, r_ref, o_ref, *, relu):
    """Same as above, plus fused residual add (shortcut) before the ReLU."""
    acc = jnp.dot(x_ref[...], w_ref[...], preferred_element_type=jnp.float32)
    out = acc * s_ref[...] + b_ref[...] + r_ref[...].astype(jnp.float32)
    if relu:
        out = jnp.maximum(out, 0.0)
    o_ref[...] = out.astype(o_ref.dtype)


def _conv1_shortcut_kernel(x_ref, w1_ref, s1_ref, b1_ref,
                           ws_ref, ss_ref, bs_ref, o1_ref, os_ref):
    """conv1 (bn+relu) and the 1x1 projection shortcut (bn) sharing one x tile."""
    x = x_ref[...]
    a1 = jnp.dot(x, w1_ref[...], preferred_element_type=jnp.float32)
    o1_ref[...] = jnp.maximum(a1 * s1_ref[...] + b1_ref[...], 0.0
                              ).astype(o1_ref.dtype)
    asc = jnp.dot(x, ws_ref[...], preferred_element_type=jnp.float32)
    os_ref[...] = (asc * ss_ref[...] + bs_ref[...]).astype(os_ref.dtype)


def _conv3x3_bn_relu_kernel(x_ref, w_ref, s_ref, b_ref, o_ref, *,
                            tro, stride, wout, cin, cout):
    """3x3 conv for one (batch, output-row-tile) grid cell, fused BN + ReLU.

    x_ref: (1, Hp, Wp//stride, stride*cin)  column-phase-folded padded image
    w_ref: (3, 3, cin, cout)                bf16 taps (VMEM-resident)
    o_ref: (1, tro, wout, cout)             strided output row tile

    9 accumulated MXU dots (no im2col patch).  Column stride is handled by the
    lane-folded layout (lane slices are free); row stride by a major-axis
    reshape of the loaded rows.
    """
    r = pl.program_id(1)
    rd = tro * stride
    row0 = r * rd
    if rd % 8 == 0:
        row0 = pl.multiple_of(row0, 8)

    acc = jnp.zeros((tro * wout, cout), jnp.float32)
    for ky in range(3):
        rows = x_ref[0, pl.ds(row0 + ky, rd), :, :]     # (rd, Wfold, stride*cin)
        if stride != 1:
            rows = rows.reshape(tro, stride, rows.shape[1], rows.shape[2])[:, 0]
        for kx in range(3):
            qc0 = kx // stride                          # folded-column offset
            pc = kx % stride                            # column phase (lane slice)
            xt = rows[:, qc0:qc0 + wout, pc * cin:(pc + 1) * cin]
            acc = acc + jnp.dot(xt.reshape(tro * wout, cin), w_ref[ky, kx],
                                preferred_element_type=jnp.float32)

    out = jnp.maximum(acc * s_ref[...] + b_ref[...], 0.0)
    o_ref[0] = out.reshape(tro, wout, cout).astype(o_ref.dtype)


# ----------------------------------------------------------------------------
# pallas_call wrappers
# ----------------------------------------------------------------------------
def conv1x1_bn(x2d, w, scale, bias, *, relu, residual=None,
               out_dtype=jnp.bfloat16, tm_target=512):
    """Tiled (M, cin) x (cin, cout) matmul with fused BN / ReLU / residual.

    Grid is 1-D over M only; the weight and BN vectors have grid-invariant
    index_maps so they are fetched once and stay VMEM-resident.
    """
    m, cin = x2d.shape
    cout = w.shape[1]
    tm = _pick_tile(m, tm_target, 8)

    in_specs = [
        pl.BlockSpec((tm, cin), lambda i: (i, 0)),
        pl.BlockSpec((cin, cout), lambda i: (0, 0)),      # resident weight
        pl.BlockSpec((1, cout), lambda i: (0, 0)),
        pl.BlockSpec((1, cout), lambda i: (0, 0)),
    ]
    args = [x2d, w, scale.reshape(1, cout), bias.reshape(1, cout)]
    if residual is None:
        kern = functools.partial(_conv1x1_bn_kernel, relu=relu)
    else:
        in_specs.append(pl.BlockSpec((tm, cout), lambda i: (i, 0)))
        args.append(residual)
        kern = functools.partial(_conv1x1_bn_res_kernel, relu=relu)

    # TODO(synk): on v6e consider pipeline_mode=pl.Buffered(3) on the x tile.
    return pl.pallas_call(
        kern,
        out_shape=jax.ShapeDtypeStruct((m, cout), out_dtype),
        grid=(m // tm,),
        in_specs=in_specs,
        out_specs=pl.BlockSpec((tm, cout), lambda i: (i, 0)),
        compiler_params=pltpu.CompilerParams(
            dimension_semantics=("parallel",),
            vmem_limit_bytes=_vmem_budget()),
    )(*args)


def conv1x1_bn_dual(x2d, w1, s1, b1, ws, ss, bs, *, tm_target=512):
    """conv1 (bn+relu) and the projection shortcut (bn) fused in one call."""
    m, cin = x2d.shape
    c1 = w1.shape[1]
    cs = ws.shape[1]
    tm = _pick_tile(m, tm_target, 8)
    return pl.pallas_call(
        _conv1_shortcut_kernel,
        out_shape=(jax.ShapeDtypeStruct((m, c1), jnp.bfloat16),
                   jax.ShapeDtypeStruct((m, cs), jnp.bfloat16)),
        grid=(m // tm,),
        in_specs=[
            pl.BlockSpec((tm, cin), lambda i: (i, 0)),
            pl.BlockSpec((cin, c1), lambda i: (0, 0)),
            pl.BlockSpec((1, c1), lambda i: (0, 0)),
            pl.BlockSpec((1, c1), lambda i: (0, 0)),
            pl.BlockSpec((cin, cs), lambda i: (0, 0)),
            pl.BlockSpec((1, cs), lambda i: (0, 0)),
            pl.BlockSpec((1, cs), lambda i: (0, 0)),
        ],
        out_specs=(pl.BlockSpec((tm, c1), lambda i: (i, 0)),
                   pl.BlockSpec((tm, cs), lambda i: (i, 0))),
        compiler_params=pltpu.CompilerParams(
            dimension_semantics=("parallel",),
            vmem_limit_bytes=_vmem_budget()),
    )(x2d, w1, s1.reshape(1, c1), b1.reshape(1, c1),
      ws, ss.reshape(1, cs), bs.reshape(1, cs))


def conv3x3_bn_relu(x_nhwc, w, scale, bias, stride, *, row_tile_target=8):
    n, h, wdim, cin = x_nhwc.shape
    cout = w.shape[-1]
    hout = (h - 1) // stride + 1
    wout = (wdim - 1) // stride + 1

    # Pad to the exact window the strided taps need (1 px halo + stride slack).
    hp = hout * stride + 2
    wp = (wout + _cdiv(2, stride)) * stride
    xp = jnp.pad(x_nhwc, ((0, 0), (1, hp - h - 1), (1, wp - wdim - 1), (0, 0)))
    # TODO(synk): fuse this halo pad into conv1's output (offset index_map +
    #             input_output_aliases) to save one HBM round trip.

    # Fold the column phase into the lane axis (free: contiguous HBM reshape).
    wfold = wp // stride
    xf = xp.reshape(n, hp, wfold, stride * cin)

    tro = _pick_tile(hout, row_tile_target, 1)   # output rows per grid step
    kern = functools.partial(_conv3x3_bn_relu_kernel, tro=tro, stride=stride,
                             wout=wout, cin=cin, cout=cout)
    return pl.pallas_call(
        kern,
        out_shape=jax.ShapeDtypeStruct((n, hout, wout, cout), jnp.bfloat16),
        grid=(n, hout // tro),
        in_specs=[
            # Full folded image per batch element; index_map ignores the row
            # axis so it is fetched once per batch element and reused.
            pl.BlockSpec((1, hp, wfold, stride * cin), lambda b, r: (b, 0, 0, 0)),
            pl.BlockSpec((3, 3, cin, cout), lambda b, r: (0, 0, 0, 0)),
            pl.BlockSpec((1, cout), lambda b, r: (0, 0)),
            pl.BlockSpec((1, cout), lambda b, r: (0, 0)),
        ],
        out_specs=pl.BlockSpec((1, tro, wout, cout), lambda b, r: (b, r, 0, 0)),
        compiler_params=pltpu.CompilerParams(
            dimension_semantics=("parallel", "parallel"),
            vmem_limit_bytes=_vmem_budget()),
    )(xf, w, scale.reshape(1, cout), bias.reshape(1, cout))


# ----------------------------------------------------------------------------
# Bottleneck forward (Pallas path)
# ----------------------------------------------------------------------------
def bottleneck_forward(x_nchw, params, in_planes, planes, stride=1):
    out_planes = EXPANSION * planes
    cin_p = _round_up(in_planes, LANE)
    mid_p = _round_up(planes, LANE)
    out_p = _round_up(out_planes, LANE)

    x = jnp.transpose(x_nchw, (0, 2, 3, 1))              # NCHW -> NHWC
    x = _pad_last(x, cin_p).astype(jnp.bfloat16)          # lane-dense, bf16
    n, h, wdim, _ = x.shape
    hout = (h - 1) // stride + 1
    wout = (wdim - 1) // stride + 1

    s1, b1 = _fold_bn(*params["bn1"], mid_p)
    s2, b2 = _fold_bn(*params["bn2"], mid_p)
    s3, b3 = _fold_bn(*params["bn3"], out_p)
    w1 = _pad_w2d(params["w1"], cin_p, mid_p).astype(jnp.bfloat16)
    w2 = jnp.pad(params["w2"], ((0, 0), (0, 0),
                                (0, mid_p - planes), (0, mid_p - planes))
                 ).astype(jnp.bfloat16)
    w3 = _pad_w2d(params["w3"], mid_p, out_p).astype(jnp.bfloat16)

    has_proj = stride != 1 or in_planes != out_planes
    if has_proj:
        ss, bs = _fold_bn(*params["bns"], out_p)
        ws = _pad_w2d(params["ws"], cin_p, out_p).astype(jnp.bfloat16)

    x2d = x.reshape(n * h * wdim, cin_p)

    # conv1 (1x1) + bn1 + relu  [+ fused projection shortcut when stride == 1]
    if has_proj and stride == 1:
        out, sc = conv1x1_bn_dual(x2d, w1, s1, b1, ws, ss, bs)
    else:
        out = conv1x1_bn(x2d, w1, s1, b1, relu=True)
        if has_proj:
            xs = x[:, ::stride, ::stride, :]
            # TODO(synk): fold this stride subsample into the shortcut conv's
            #             input BlockSpec (strided index_map) instead of an
            #             XLA slice pass.
            sc = conv1x1_bn(xs.reshape(n * hout * wout, cin_p), ws, ss, bs,
                            relu=False)
        else:
            sc = x2d                                      # identity shortcut

    # conv2 (3x3, stride) + bn2 + relu  (strided rows & columns in-kernel)
    out = conv3x3_bn_relu(out.reshape(n, h, wdim, mid_p), w2, s2, b2, stride)
    out = out.reshape(n * hout * wout, mid_p)

    # conv3 (1x1) + bn3 + residual add + relu, fused in a single kernel
    y = conv1x1_bn(out, w3, s3, b3, relu=True, residual=sc,
                   out_dtype=jnp.float32)
    y = y.reshape(n, hout, wout, out_p)[..., :out_planes]
    return jnp.transpose(y, (0, 3, 1, 2))                 # NHWC -> NCHW


# ----------------------------------------------------------------------------
# Pure-JAX reference (correctness check only, f32)
# ----------------------------------------------------------------------------
def bottleneck_reference(x_nchw, params, in_planes, planes, stride=1):
    out_planes = EXPANSION * planes
    dn = ("NHWC", "HWIO", "NHWC")
    x = jnp.transpose(x_nchw, (0, 2, 3, 1))

    def bn(y, g, b, m, v):
        return (y - m) / jnp.sqrt(v + BN_EPS) * g + b

    out = jax.lax.conv_general_dilated(
        x, params["w1"].reshape(1, 1, in_planes, planes), (1, 1), "VALID",
        dimension_numbers=dn)
    out = jax.nn.relu(bn(out, *params["bn1"]))
    out = jax.lax.conv_general_dilated(
        out, params["w2"], (stride, stride), ((1, 1), (1, 1)),
        dimension_numbers=dn)
    out = jax.nn.relu(bn(out, *params["bn2"]))
    out = jax.lax.conv_general_dilated(
        out, params["w3"].reshape(1, 1, planes, out_planes), (1, 1), "VALID",
        dimension_numbers=dn)
    out = bn(out, *params["bn3"])
    if stride != 1 or in_planes != out_planes:
        sc = jax.lax.conv_general_dilated(
            x, params["ws"].reshape(1, 1, in_planes, out_planes),
            (stride, stride), "VALID", dimension_numbers=dn)
        sc = bn(sc, *params["bns"])
    else:
        sc = x
    out = jax.nn.relu(out + sc)
    return jnp.transpose(out, (0, 3, 1, 2))


# ----------------------------------------------------------------------------
# Deterministic parameter init
# ----------------------------------------------------------------------------
def _bn_params(key, c):
    k1, k2, k3, k4 = jax.random.split(key, 4)
    gamma = 1.0 + 0.1 * jax.random.normal(k1, (c,), jnp.float32)
    beta = 0.1 * jax.random.normal(k2, (c,), jnp.float32)
    mean = 0.05 * jax.random.normal(k3, (c,), jnp.float32)
    var = 0.5 + jnp.abs(jax.random.normal(k4, (c,), jnp.float32)) * 0.5
    return (gamma, beta, mean, var)


def init_params(key, in_planes, planes, stride):
    out_planes = EXPANSION * planes
    ks = jax.random.split(key, 8)
    params = {
        "w1": 0.1 * jax.random.normal(ks[0], (in_planes, planes), jnp.float32),
        "bn1": _bn_params(ks[1], planes),
        "w2": 0.1 * jax.random.normal(ks[2], (3, 3, planes, planes), jnp.float32),
        "bn2": _bn_params(ks[3], planes),
        "w3": 0.1 * jax.random.normal(ks[4], (planes, out_planes), jnp.float32),
        "bn3": _bn_params(ks[5], out_planes),
    }
    if stride != 1 or in_planes != out_planes:
        params["ws"] = 0.1 * jax.random.normal(
            ks[6], (in_planes, out_planes), jnp.float32)
        params["bns"] = _bn_params(ks[7], out_planes)
    return params


# ----------------------------------------------------------------------------
if __name__ == "__main__":
    key = jax.random.PRNGKey(0)

    configs = [
        # (in_planes, planes, stride)
        (4, 4, 1),    # projection shortcut, stride 1 (fused dual-output conv1)
        (16, 4, 1),   # identity shortcut
        (8, 4, 2),    # downsampling block (stride 2 + projection shortcut)
    ]
    N, H, W = 2, 16, 16

    for idx, (in_planes, planes, stride) in enumerate(configs):
        kx, kp = jax.random.split(jax.random.fold_in(key, idx))
        x = jax.random.normal(kx, (N, in_planes, H, W), jnp.float32)  # NCHW
        params = init_params(kp, in_planes, planes, stride)

        y = jax.block_until_ready(
            bottleneck_forward(x, params, in_planes, planes, stride))
        y_ref = bottleneck_reference(x, params, in_planes, planes, stride)

        hout = (H - 1) // stride + 1
        wout = (W - 1) // stride + 1
        assert y.shape == (N, EXPANSION * planes, hout, wout)
        # bf16 matmul operands vs f32 reference -> loosened tolerance.
        assert jnp.allclose(y, y_ref, atol=5e-2, rtol=5e-2), \
            f"Pallas result mismatch for config {(in_planes, planes, stride)}"

    print("KERNEL_OK")
</pallas_src>

<mosaic_0001>
module attributes {stable_mosaic.version = 11 : i64} {
  func.func @_conv1_shortcut_kernel(%arg0: i32, %arg1: memref<512x128xbf16, #tpu.memory_space<vmem>>, %arg2: memref<128x128xbf16, #tpu.memory_space<vmem>>, %arg3: memref<1x128xf32, #tpu.memory_space<vmem>>, %arg4: memref<1x128xf32, #tpu.memory_space<vmem>>, %arg5: memref<128x128xbf16, #tpu.memory_space<vmem>>, %arg6: memref<1x128xf32, #tpu.memory_space<vmem>>, %arg7: memref<1x128xf32, #tpu.memory_space<vmem>>, %arg8: memref<512x128xbf16, #tpu.memory_space<vmem>>, %arg9: memref<512x128xbf16, #tpu.memory_space<vmem>>) attributes {dimension_semantics = [#tpu.dimension_semantics<parallel>], iteration_bounds = array<i64: 1>, scalar_prefetch = 0 : i64, scratch_operands = 0 : i64, tpu.core_type = #tpu.core_type<tc>, window_params = [{transform_indices = @transform_0, window_bounds = array<i64: 512, 128>}, {pipeline_mode = #tpu.pipeline_mode<synchronous>, transform_indices = @transform_1, window_bounds = array<i64: 128, 128>}, {pipeline_mode = #tpu.pipeline_mode<synchronous>, transform_indices = @transform_2, window_bounds = array<i64: 1, 128>}, {pipeline_mode = #tpu.pipeline_mode<synchronous>, transform_indices = @transform_3, window_bounds = array<i64: 1, 128>}, {pipeline_mode = #tpu.pipeline_mode<synchronous>, transform_indices = @transform_4, window_bounds = array<i64: 128, 128>}, {pipeline_mode = #tpu.pipeline_mode<synchronous>, transform_indices = @transform_5, window_bounds = array<i64: 1, 128>}, {pipeline_mode = #tpu.pipeline_mode<synchronous>, transform_indices = @transform_6, window_bounds = array<i64: 1, 128>}, {transform_indices = @transform_7, window_bounds = array<i64: 512, 128>}, {transform_indices = @transform_8, window_bounds = array<i64: 512, 128>}]} {
    %c0 = arith.constant 0 : index
    %c0_0 = arith.constant 0 : index
    %0 = vector.load %arg1[%c0, %c0_0] : memref<512x128xbf16, #tpu.memory_space<vmem>>, vector<512x128xbf16>
    %c0_1 = arith.constant 0 : index
    %c0_2 = arith.constant 0 : index
    %1 = vector.load %arg2[%c0_1, %c0_2] : memref<128x128xbf16, #tpu.memory_space<vmem>>, vector<128x128xbf16>
    %cst = arith.constant dense<0.000000e+00> : vector<512x128xf32>
    %2 = tpu.matmul %0, %1, %cst {dimension_numbers = #tpu.dot_dimension_numbers<[1], [0], [0], [1], [0, 0, 1, 1], [], []>} : vector<512x128xbf16>, vector<128x128xbf16>, vector<512x128xf32> -> vector<512x128xf32>
    %c0_3 = arith.constant 0 : index
    %c0_4 = arith.constant 0 : index
    %3 = vector.load %arg3[%c0_3, %c0_4] : memref<1x128xf32, #tpu.memory_space<vmem>>, vector<1x128xf32>
    %4 = vector.broadcast %3 : vector<1x128xf32> to vector<512x128xf32>
    %5 = arith.mulf %2, %4 : vector<512x128xf32>
    %c0_5 = arith.constant 0 : index
    %c0_6 = arith.constant 0 : index
    %6 = vector.load %arg4[%c0_5, %c0_6] : memref<1x128xf32, #tpu.memory_space<vmem>>, vector<1x128xf32>
    %7 = vector.broadcast %6 : vector<1x128xf32> to vector<512x128xf32>
    %8 = arith.addf %5, %7 : vector<512x128xf32>
    %cst_7 = arith.constant 0.000000e+00 : f32
    %9 = vector.broadcast %cst_7 : f32 to vector<512x128xf32>
    %10 = arith.maximumf %8, %9 : vector<512x128xf32>
    %11 = arith.truncf %10 : vector<512x128xf32> to vector<512x128xbf16>
    %c0_8 = arith.constant 0 : index
    %c0_9 = arith.constant 0 : index
    %12 = vector.load %arg8[%c0_8, %c0_9] : memref<512x128xbf16, #tpu.memory_space<vmem>>, vector<512x128xbf16>
    tpu.vector_store %arg8[%c0_8, %c0_9], %11 {strides = array<i32>} : memref<512x128xbf16, #tpu.memory_space<vmem>>, vector<512x128xbf16>,
    %c0_10 = arith.constant 0 : index
    %c0_11 = arith.constant 0 : index
    %13 = vector.load %arg5[%c0_10, %c0_11] : memref<128x128xbf16, #tpu.memory_space<vmem>>, vector<128x128xbf16>
    %cst_12 = arith.constant dense<0.000000e+00> : vector<512x128xf32>
    %14 = tpu.matmul %0, %13, %cst_12 {dimension_numbers = #tpu.dot_dimension_numbers<[1], [0], [0], [1], [0, 0, 1, 1], [], []>} : vector<512x128xbf16>, vector<128x128xbf16>, vector<512x128xf32> -> vector<512x128xf32>
    %c0_13 = arith.constant 0 : index
    %c0_14 = arith.constant 0 : index
    %15 = vector.load %arg6[%c0_13, %c0_14] : memref<1x128xf32, #tpu.memory_space<vmem>>, vector<1x128xf32>
    %16 = vector.broadcast %15 : vector<1x128xf32> to vector<512x128xf32>
    %17 = arith.mulf %14, %16 : vector<512x128xf32>
    %c0_15 = arith.constant 0 : index
    %c0_16 = arith.constant 0 : index
    %18 = vector.load %arg7[%c0_15, %c0_16] : memref<1x128xf32, #tpu.memory_space<vmem>>, vector<1x128xf32>
    %19 = vector.broadcast %18 : vector<1x128xf32> to vector<512x128xf32>
    %20 = arith.addf %17, %19 : vector<512x128xf32>
    %21 = arith.truncf %20 : vector<512x128xf32> to vector<512x128xbf16>
    %c0_17 = arith.constant 0 : index
    %c0_18 = arith.constant 0 : index
    %22 = vector.load %arg9[%c0_17, %c0_18] : memref<512x128xbf16, #tpu.memory_space<vmem>>, vector<512x128xbf16>
    tpu.vector_store %arg9[%c0_17, %c0_18], %21 {strides = array<i32>} : memref<512x128xbf16, #tpu.memory_space<vmem>>, vector<512x128xbf16>,
    return
  }
  func.func @transform_0(%arg0: i32) -> (i32, i32) {
    %c0_i32 = arith.constant 0 : i32
    %c0_i32_0 = arith.constant 0 : i32
    return %arg0, %c0_i32 : i32, i32
  }
  func.func @transform_1(%arg0: i32) -> (i32, i32) {
    %c0_i32 = arith.constant 0 : i32
    %c0_i32_0 = arith.constant 0 : i32
    %c0_i32_1 = arith.constant 0 : i32
    return %c0_i32, %c0_i32_0 : i32, i32
  }
  func.func @transform_2(%arg0: i32) -> (i32, i32) {
    %c0_i32 = arith.constant 0 : i32
    %c0_i32_0 = arith.constant 0 : i32
    %c0_i32_1 = arith.constant 0 : i32
    return %c0_i32, %c0_i32_0 : i32, i32
  }
  func.func @transform_3(%arg0: i32) -> (i32, i32) {
    %c0_i32 = arith.constant 0 : i32
    %c0_i32_0 = arith.constant 0 : i32
    %c0_i32_1 = arith.constant 0 : i32
    return %c0_i32, %c0_i32_0 : i32, i32
  }
  func.func @transform_4(%arg0: i32) -> (i32, i32) {
    %c0_i32 = arith.constant 0 : i32
    %c0_i32_0 = arith.constant 0 : i32
    %c0_i32_1 = arith.constant 0 : i32
    return %c0_i32, %c0_i32_0 : i32, i32
  }
  func.func @transform_5(%arg0: i32) -> (i32, i32) {
    %c0_i32 = arith.constant 0 : i32
    %c0_i32_0 = arith.constant 0 : i32
    %c0_i32_1 = arith.constant 0 : i32
    return %c0_i32, %c0_i32_0 : i32, i32
  }
  func.func @transform_6(%arg0: i32) -> (i32, i32) {
    %c0_i32 = arith.constant 0 : i32
    %c0_i32_0 = arith.constant 0 : i32
    %c0_i32_1 = arith.constant 0 : i32
    return %c0_i32, %c0_i32_0 : i32, i32
  }
  func.func @transform_7(%arg0: i32) -> (i32, i32) {
    %c0_i32 = arith.constant 0 : i32
    %c0_i32_0 = arith.constant 0 : i32
    return %arg0, %c0_i32 : i32, i32
  }
  func.func @transform_8(%arg0: i32) -> (i32, i32) {
    %c0_i32 = arith.constant 0 : i32
    %c0_i32_0 = arith.constant 0 : i32
    return %arg0, %c0_i32 : i32, i32
  }
}

</mosaic_0001>

<llo_original>
// kernel: tpu_custom_call.1
$region0: #{tpu_custom_call.1}
  #allocation0 [shape = 'u32[]', space=smem, size = 0x4, offset = 0x4, fixed_abs, tag = 'smem constant byte address 0x4 - core index']
  #allocation1 [shape = 'u32[72,128]{1,0:T(1,128)}', space=vmem, size = 0x9000, scoped, tag = 'internal scratch']
  %s0 = inlined_call_operand.hbm [shape: bf16[512,128], index: 0, kind: input, shape index: {}]
  %s1 = inlined_call_operand.hbm [shape: bf16[128,128], index: 1, kind: input, shape index: {}]
  %s2 = inlined_call_operand.vmem [shape: f32[1,128], index: 2, kind: input, shape index: {}]
  %s3 = inlined_call_operand.vmem [shape: f32[1,128], index: 3, kind: input, shape index: {}]
  %s4 = inlined_call_operand.hbm [shape: bf16[128,128], index: 4, kind: input, shape index: {}]
  %s5 = inlined_call_operand.vmem [shape: f32[1,128], index: 5, kind: input, shape index: {}]
  %s6 = inlined_call_operand.vmem [shape: f32[1,128], index: 6, kind: input, shape index: {}]
  %s7 = inlined_call_operand.hbm [shape: bf16[512,128], index: 7, kind: output, shape index: {0}]
  %s8 = inlined_call_operand.hbm [shape: bf16[512,128], index: 8, kind: output, shape index: {1}]
  %9 = xla_tuple %s7, %s8
  %s10 = sld [smem:[#allocation0]]
  $region58: #{tpu_custom_call.1} parent=0
    _
  %s12 = ssub.s32 1, %s10
  %s13 = scalar_select 0, %s12, %s10
  $region1: #{tpu_custom_call.1} parent=0
    #allocation2 [shape = 'u8[131072]{0}', space=vmem, size = 0x20000, scoped, tag = 'input window, operand 0, single buffered']
    #allocation3 [shape = 's32[1]{0}', space=sflag, size = 0x4, scoped, tag = 'scoped memory for tpu_custom_call.1']
    #allocation4 [shape = 's32[1]{0}', space=sflag, size = 0x4, scoped, tag = 'scoped memory for tpu_custom_call.1']
    #allocation5 [shape = 'u8[32768]{0}', space=vmem, size = 0x8000, scoped, tag = 'input window, operand 1, single buffered']
    #allocation6 [shape = 's32[1]{0}', space=sflag, size = 0x4, scoped, tag = 'scoped memory for tpu_custom_call.1']
    #allocation7 [shape = 'u8[32768]{0}', space=vmem, size = 0x8000, scoped, tag = 'input window, operand 4, single buffered']
    #allocation8 [shape = 'u8[131072]{0}', space=vmem, size = 0x20000, scoped, tag = 'output window, operand 0, single buffered']
    #allocation9 [shape = 'u8[131072]{0}', space=vmem, size = 0x20000, scoped, tag = 'output window, operand 1, single buffered']
    #allocation10 [shape = 's32[1]{0}', space=sflag, size = 0x4, scoped, tag = 'scoped memory for tpu_custom_call.1']
    %14 = vsyncpa [#allocation3], 0
    %15 = vsyncpa [#allocation6], 0
    %16 = vsyncpa [#allocation4], 0
    %17 = vsyncpa [#allocation10], 0
    // Predicated region
    $region2: #{tpu_custom_call.1} parent=1 // pred_check
      _
    $region3: #{tpu_custom_call.1} parent=1 // pred_check_branch
      %19 = sbr.rel (0) target = $region5
    $region4: #{tpu_custom_call.1} parent=1 // pred_region
      %21 = vsyncadd [#allocation3], 0
      %s22 = sshll.u32 %s0, 4
      %s23 = int_to_ptr.hbm [resolvable:$true] %s22
      %s24 = sshll.u32 [#allocation2], 4
      %s25 = int_to_ptr.vmem [resolvable:$true] %s24
      %30 = dma.hbm_to_vmem [thread:$0]  %s23, 4096, %s25, [#allocation3], 64, 64, 4
    $region5: #{tpu_custom_call.1} parent=1 // pred_fallthru
      _
    // Predicated region
    $region6: #{tpu_custom_call.1} parent=1 // pred_check
      _
    $region7: #{tpu_custom_call.1} parent=1 // pred_check_branch
      %32 = sbr.rel (0) target = $region9
    $region8: #{tpu_custom_call.1} parent=1 // pred_region
      %34 = vsyncadd [#allocation6], 0
      %s35 = sshll.u32 %s1, 4
      %s36 = int_to_ptr.hbm [resolvable:$true] %s35
      %s37 = sshll.u32 [#allocation5], 4
      %s38 = int_to_ptr.vmem [resolvable:$true] %s37
      %43 = dma.hbm_to_vmem [thread:$0]  %s36, 1024, %s38, [#allocation6], 64, 64, 4
    $region9: #{tpu_custom_call.1} parent=1 // pred_fallthru
      _
    // Predicated region
    $region10: #{tpu_custom_call.1} parent=1 // pred_check
      _
    $region11: #{tpu_custom_call.1} parent=1 // pred_check_branch
      %45 = sbr.rel (0) target = $region13
    $region12: #{tpu_custom_call.1} parent=1 // pred_region
      _
    $region13: #{tpu_custom_call.1} parent=1 // pred_fallthru
      _
    // Predicated region
    $region14: #{tpu_custom_call.1} parent=1 // pred_check
      _
    $region15: #{tpu_custom_call.1} parent=1 // pred_check_branch
      %47 = sbr.rel (0) target = $region17
    $region16: #{tpu_custom_call.1} parent=1 // pred_region
      _
    $region17: #{tpu_custom_call.1} parent=1 // pred_fallthru
      _
    // Predicated region
    $region18: #{tpu_custom_call.1} parent=1 // pred_check
      _
    $region19: #{tpu_custom_call.1} parent=1 // pred_check_branch
      %49 = sbr.rel (0) target = $region21
    $region20: #{tpu_custom_call.1} parent=1 // pred_region
      %51 = vsyncadd [#allocation6], 0
      %s52 = sshll.u32 %s4, 4
      %s53 = int_to_ptr.hbm [resolvable:$true] %s52
      %s54 = sshll.u32 [#allocation7], 4
      %s55 = int_to_ptr.vmem [resolvable:$true] %s54
      %60 = dma.hbm_to_vmem [thread:$0]  %s53, 1024, %s55, [#allocation6], 64, 64, 4
    $region21: #{tpu_custom_call.1} parent=1 // pred_fallthru
      _
    // Predicated region
    $region22: #{tpu_custom_call.1} parent=1 // pred_check
      _
    $region23: #{tpu_custom_call.1} parent=1 // pred_check_branch
      %62 = sbr.rel (0) target = $region25
    $region24: #{tpu_custom_call.1} parent=1 // pred_region
      _
    $region25: #{tpu_custom_call.1} parent=1 // pred_fallthru
      _
    // Predicated region
    $region26: #{tpu_custom_call.1} parent=1 // pred_check
      _
    $region27: #{tpu_custom_call.1} parent=1 // pred_check_branch
      %64 = sbr.rel (0) target = $region29
    $region28: #{tpu_custom_call.1} parent=1 // pred_region
      _
    $region29: #{tpu_custom_call.1} parent=1 // pred_fallthru
      _
    // Predicated region
    $region30: #{tpu_custom_call.1} parent=1 // pred_check
      _
    $region31: #{tpu_custom_call.1} parent=1 // pred_check_branch
      %66 = sbr.rel (0) target = $region33
    $region32: #{tpu_custom_call.1} parent=1 // pred_region
      %68 = dma.done [#allocation3], 4096
    $region33: #{tpu_custom_call.1} parent=1 // pred_fallthru
      _
    // Predicated region
    $region34: #{tpu_custom_call.1} parent=1 // pred_check
      _
    $region35: #{tpu_custom_call.1} parent=1 // pred_check_branch
      %70 = sbr.rel (0) target = $region37
    $region36: #{tpu_custom_call.1} parent=1 // pred_region
      %72 = dma.done [#allocation6], 1024
    $region37: #{tpu_custom_call.1} parent=1 // pred_fallthru
      _
    // Predicated region
    $region38: #{tpu_custom_call.1} parent=1 // pred_check
      _
    $region39: #{tpu_custom_call.1} parent=1 // pred_check_branch
      %74 = sbr.rel (0) target = $region41
    $region40: #{tpu_custom_call.1} parent=1 // pred_region
      %76 = dma.done [#allocation6], 1024
    $region41: #{tpu_custom_call.1} parent=1 // pred_fallthru
      _
    %v77 = vld [vmem:[#allocation2] sm:$0xf]
    %v78 = vld [vmem:[#allocation2 + $0x4] sm:$0xf]
    %v79 = vld [vmem:[#allocation2 + $0x8] sm:$0xf]
    %v80 = vld [vmem:[#allocation2 + $0xc] sm:$0xf]
    %v81 = vld [vmem:[#allocation2 + $0x10] sm:$0xf]
    %v82 = vld [vmem:[#allocation2 + $0x14] sm:$0xf]
    %v83 = vld [vmem:[#allocation2 + $0x18] sm:$0xf]
    %v84 = vld [vmem:[#allocation2 + $0x1c] sm:$0xf]
    %v85 = vld [vmem:[#allocation2 + $0x20] sm:$0xf]
    %v86 = vld [vmem:[#allocation2 + $0x24] sm:$0xf]
    %v87 = vld [vmem:[#allocation2 + $0x28] sm:$0xf]
    %v88 = vld [vmem:[#allocation2 + $0x2c] sm:$0xf]
    %v89 = vld [vmem:[#allocation2 + $0x30] sm:$0xf]
    %v90 = vld [vmem:[#allocation2 + $0x34] sm:$0xf]
    %v91 = vld [vmem:[#allocation2 + $0x38] sm:$0xf]
    %v92 = vld [vmem:[#allocation2 + $0x3c] sm:$0xf]
    %v93 = vld [vmem:[#allocation2 + $0x40] sm:$0xf]
    %v94 = vld [vmem:[#allocation2 + $0x44] sm:$0xf]
    %v95 = vld [vmem:[#allocation2 + $0x48] sm:$0xf]
    %v96 = vld [vmem:[#allocation2 + $0x4c] sm:$0xf]
    %v97 = vld [vmem:[#allocation2 + $0x50] sm:$0xf]
    %v98 = vld [vmem:[#allocation2 + $0x54] sm:$0xf]
    %v99 = vld [vmem:[#allocation2 + $0x58] sm:$0xf]
    %v100 = vld [vmem:[#allocation2 + $0x5c] sm:$0xf]
    %v101 = vld [vmem:[#allocation2 + $0x60] sm:$0xf]
    %v102 = vld [vmem:[#allocation2 + $0x64] sm:$0xf]
    %v103 = vld [vmem:[#allocation2 + $0x68] sm:$0xf]
    %v104 = vld [vmem:[#allocation2 + $0x6c] sm:$0xf]
    %v105 = vld [vmem:[#allocation2 + $0x70] sm:$0xf]
    %v106 = vld [vmem:[#allocation2 + $0x74] sm:$0xf]
    %v107 = vld [vmem:[#allocation2 + $0x78] sm:$0xf]
    %v108 = vld [vmem:[#allocation2 + $0x7c] sm:$0xf]
    %v109 = vld [vmem:[#allocation2 + $0x80] sm:$0xf]
    %v110 = vld [vmem:[#allocation2 + $0x84] sm:$0xf]
    %v111 = vld [vmem:[#allocation2 + $0x88] sm:$0xf]
    %v112 = vld [vmem:[#allocation2 + $0x8c] sm:$0xf]
    %v113 = vld [vmem:[#allocation2 + $0x90] sm:$0xf]
    %v114 = vld [vmem:[#allocation2 + $0x94] sm:$0xf]
    %v115 = vld [vmem:[#allocation2 + $0x98] sm:$0xf]
    %v116 = vld [vmem:[#allocation2 + $0x9c] sm:$0xf]
    %v117 = vld [vmem:[#allocation2 + $0xa0] sm:$0xf]
    %v118 = vld [vmem:[#allocation2 + $0xa4] sm:$0xf]
    %v119 = vld [vmem:[#allocation2 + $0xa8] sm:$0xf]
    %v120 = vld [vmem:[#allocation2 + $0xac] sm:$0xf]
    %v121 = vld [vmem:[#allocation2 + $0xb0] sm:$0xf]
    %v122 = vld [vmem:[#allocation2 + $0xb4] sm:$0xf]
    %v123 = vld [vmem:[#allocation2 + $0xb8] sm:$0xf]
    %v124 = vld [vmem:[#allocation2 + $0xbc] sm:$0xf]
    %v125 = vld [vmem:[#allocation2 + $0xc0] sm:$0xf]
    %v126 = vld [vmem:[#allocation2 + $0xc4] sm:$0xf]
    %v127 = vld [vmem:[#allocation2 + $0xc8] sm:$0xf]
    %v128 = vld [vmem:[#allocation2 + $0xcc] sm:$0xf]
    %v129 = vld [vmem:[#allocation2 + $0xd0] sm:$0xf]
    %v130 = vld [vmem:[#allocation2 + $0xd4] sm:$0xf]
    %v131 = vld [vmem:[#allocation2 + $0xd8] sm:$0xf]
    %v132 = vld [vmem:[#allocation2 + $0xdc] sm:$0xf]
    %v133 = vld [vmem:[#allocation2 + $0xe0] sm:$0xf]
    %v134 = vld [vmem:[#allocation2 + $0xe4] sm:$0xf]
    %v135 = vld [vmem:[#allocation2 + $0xe8] sm:$0xf]
    %v136 = vld [vmem:[#allocation2 + $0xec] sm:$0xf]
    %v137 = vld [vmem:[#allocation2 + $0xf0] sm:$0xf]
    %v138 = vld [vmem:[#allocation2 + $0xf4] sm:$0xf]
    %v139 = vld [vmem:[#allocation2 + $0xf8] sm:$0xf]
    %v140 = vld [vmem:[#allocation2 + $0xfc] sm:$0xf]
    %v141 = vld [vmem:[#allocation5] sm:$0xf]
    %v142 = vld [vmem:[#allocation5 + $0x4] sm:$0xf]
    %v143 = vld [vmem:[#allocation5 + $0x8] sm:$0xf]
    %v144 = vld [vmem:[#allocation5 + $0xc] sm:$0xf]
    %v145 = vld [vmem:[#allocation5 + $0x10] sm:$0xf]
    %v146 = vld [vmem:[#allocation5 + $0x14] sm:$0xf]
    %v147 = vld [vmem:[#allocation5 + $0x18] sm:$0xf]
    %v148 = vld [vmem:[#allocation5 + $0x1c] sm:$0xf]
    %v149 = vld [vmem:[#allocation5 + $0x20] sm:$0xf]
    %v150 = vld [vmem:[#allocation5 + $0x24] sm:$0xf]
    %v151 = vld [vmem:[#allocation5 + $0x28] sm:$0xf]
    %v152 = vld [vmem:[#allocation5 + $0x2c] sm:$0xf]
    %v153 = vld [vmem:[#allocation5 + $0x30] sm:$0xf]
    %v154 = vld [vmem:[#allocation5 + $0x34] sm:$0xf]
    %v155 = vld [vmem:[#allocation5 + $0x38] sm:$0xf]
    %v156 = vld [vmem:[#allocation5 + $0x3c] sm:$0xf]
    %v221 = vunpack.c.l.b16 %v77
    %v222 = vunpack.c.l.b16 %v78
    %v223 = vunpack.c.l.b16 %v79
    %v224 = vunpack.c.l.b16 %v80
    %v225 = vunpack.c.l.b16 %v81
    %v226 = vunpack.c.l.b16 %v82
    %v227 = vunpack.c.l.b16 %v83
    %v228 = vunpack.c.l.b16 %v84
    %v229 = vunpack.c.l.b16 %v85
    %v230 = vunpack.c.l.b16 %v86
    %v231 = vunpack.c.l.b16 %v87
    %v232 = vunpack.c.l.b16 %v88
    %v233 = vunpack.c.l.b16 %v89
    %v234 = vunpack.c.l.b16 %v90
    %v235 = vunpack.c.l.b16 %v91
    %v236 = vunpack.c.l.b16 %v92
    %v237 = vunpack.c.l.b16 %v93
    %v238 = vunpack.c.l.b16 %v94
    %v239 = vunpack.c.l.b16 %v95
    %v240 = vunpack.c.l.b16 %v96
    %v241 = vunpack.c.l.b16 %v97
    %v242 = vunpack.c.l.b16 %v98
    %v243 = vunpack.c.l.b16 %v99
    %v244 = vunpack.c.l.b16 %v100
    %v245 = vunpack.c.l.b16 %v101
    %v246 = vunpack.c.l.b16 %v102
    %v247 = vunpack.c.l.b16 %v103
    %v248 = vunpack.c.l.b16 %v104
    %v249 = vunpack.c.l.b16 %v105
    %v250 = vunpack.c.l.b16 %v106
    %v251 = vunpack.c.l.b16 %v107
    %v252 = vunpack.c.l.b16 %v108
    %v253 = vunpack.c.l.b16 %v109
    %v254 = vunpack.c.l.b16 %v110
    %v255 = vunpack.c.l.b16 %v111
    %v256 = vunpack.c.l.b16 %v112
    %v257 = vunpack.c.l.b16 %v113
    %v258 = vunpack.c.l.b16 %v114
    %v259 = vunpack.c.l.b16 %v115
    %v260 = vunpack.c.l.b16 %v116
    %v261 = vunpack.c.l.b16 %v117
    %v262 = vunpack.c.l.b16 %v118
    %v263 = vunpack.c.l.b16 %v119
    %v264 = vunpack.c.l.b16 %v120
    %v265 = vunpack.c.l.b16 %v121
    %v266 = vunpack.c.l.b16 %v122
    %v267 = vunpack.c.l.b16 %v123
    %v268 = vunpack.c.l.b16 %v124
    %v269 = vunpack.c.l.b16 %v125
    %v270 = vunpack.c.l.b16 %v126
    %v271 = vunpack.c.l.b16 %v127
    %v272 = vunpack.c.l.b16 %v128
    %v273 = vunpack.c.l.b16 %v129
    %v274 = vunpack.c.l.b16 %v130
    %v275 = vunpack.c.l.b16 %v131
    %v276 = vunpack.c.l.b16 %v132
    %v277 = vunpack.c.l.b16 %v133
    %v278 = vunpack.c.l.b16 %v134
    %v279 = vunpack.c.l.b16 %v135
    %v280 = vunpack.c.l.b16 %v136
    %v281 = vunpack.c.l.b16 %v137
    %v282 = vunpack.c.l.b16 %v138
    %v283 = vunpack.c.l.b16 %v139
    %v284 = vunpack.c.l.b16 %v140
    %v285 = vpack.c.b16 %v222, %v221
    %v286 = vpack.c.b16 %v224, %v223
    %v287 = vpack.c.b16 %v226, %v225
    %v288 = vpack.c.b16 %v228, %v227
    %v289 = vpack.c.b16 %v230, %v229
    %v290 = vpack.c.b16 %v232, %v231
    %v291 = vpack.c.b16 %v234, %v233
    %v292 = vpack.c.b16 %v236, %v235
    %v293 = vpack.c.b16 %v238, %v237
    %v294 = vpack.c.b16 %v240, %v239
    %v295 = vpack.c.b16 %v242, %v241
    %v296 = vpack.c.b16 %v244, %v243
    %v297 = vpack.c.b16 %v246, %v245
    %v298 = vpack.c.b16 %v248, %v247
    %v299 = vpack.c.b16 %v250, %v249
    %v300 = vpack.c.b16 %v252, %v251
    %v301 = vpack.c.b16 %v254, %v253
    %v302 = vpack.c.b16 %v256, %v255
    %v303 = vpack.c.b16 %v258, %v257
    %v304 = vpack.c.b16 %v260, %v259
    %v305 = vpack.c.b16 %v262, %v261
    %v306 = vpack.c.b16 %v264, %v263
    %v307 = vpack.c.b16 %v266, %v265
    %v308 = vpack.c.b16 %v268, %v267
    %v309 = vpack.c.b16 %v270, %v269
    %v310 = vpack.c.b16 %v272, %v271
    %v311 = vpack.c.b16 %v274, %v273
    %v312 = vpack.c.b16 %v276, %v275
    %v313 = vpack.c.b16 %v278, %v277
    %v314 = vpack.c.b16 %v280, %v279
    %v315 = vpack.c.b16 %v282, %v281
    %v316 = vpack.c.b16 %v284, %v283
    %v365 = vunpack.c.l.b16 %v141
    %v366 = vunpack.c.l.b16 %v142
    %v367 = vunpack.c.l.b16 %v143
    %v368 = vunpack.c.l.b16 %v144
    %v369 = vunpack.c.l.b16 %v145
    %v370 = vunpack.c.l.b16 %v146
    %v371 = vunpack.c.l.b16 %v147
    %v372 = vunpack.c.l.b16 %v148
    %v373 = vunpack.c.l.b16 %v149
    %v374 = vunpack.c.l.b16 %v150
    %v375 = vunpack.c.l.b16 %v151
    %v376 = vunpack.c.l.b16 %v152
    %v377 = vunpack.c.l.b16 %v153
    %v378 = vunpack.c.l.b16 %v154
    %v379 = vunpack.c.l.b16 %v155
    %v380 = vunpack.c.l.b16 %v156
    %v381 = vpack.c.b16 %v366, %v365
    %v382 = vpack.c.b16 %v368, %v367
    %v383 = vpack.c.b16 %v370, %v369
    %v384 = vpack.c.b16 %v372, %v371
    %v385 = vpack.c.b16 %v374, %v373
    %v386 = vpack.c.b16 %v376, %v375
    %v387 = vpack.c.b16 %v378, %v377
    %v388 = vpack.c.b16 %v380, %v379
    %397 = vmatpush.bf16.msra.mxu0 %v388
    %398 = vmatpush.bf16.msra.mxu0 %v387
    %399 = vmatpush.bf16.msra.mxu0 %v386
    %400 = vmatpush.bf16.msra.mxu0 %v385
    %401 = vmatpush.bf16.msra.mxu0 %v384
    %402 = vmatpush.bf16.msra.mxu0 %v383
    %403 = vmatpush.bf16.msra.mxu0 %v382
    %404 = vmatpush.bf16.msra.mxu0 %v381
    %405 = vmatmul.bf16.gmra.mxu0 %v285
    %v406 = vpop.f32.mrf.mxu0
    %v407 = vadd.f32 0.0, %v406
    %v408 = vpop.f32.mrf.mxu0
    %v409 = vadd.f32 0.0, %v408
    %410 = vmatmul.bf16.gmra.mxu0 %v286
    %v411 = vpop.f32.mrf.mxu0
    %v412 = vadd.f32 0.0, %v411
    %v413 = vpop.f32.mrf.mxu0
    %v414 = vadd.f32 0.0, %v413
    %415 = vmatmul.bf16.gmra.mxu0 %v287
    %v416 = vpop.f32.mrf.mxu0
    %v417 = vadd.f32 0.0, %v416
    %v418 = vpop.f32.mrf.mxu0
    %v419 = vadd.f32 0.0, %v418
    %420 = vmatmul.bf16.gmra.mxu0 %v288
    %v421 = vpop.f32.mrf.mxu0
    %v422 = vadd.f32 0.0, %v421
    %v423 = vpop.f32.mrf.mxu0
    %v424 = vadd.f32 0.0, %v423
    %425 = vmatmul.bf16.gmra.mxu0 %v289
    %v426 = vpop.f32.mrf.mxu0
    %v427 = vadd.f32 0.0, %v426
    %v428 = vpop.f32.mrf.mxu0
    %v429 = vadd.f32 0.0, %v428
    %430 = vmatmul.bf16.gmra.mxu0 %v290
    %v431 = vpop.f32.mrf.mxu0
    %v432 = vadd.f32 0.0, %v431
    %v433 = vpop.f32.mrf.mxu0
    %v434 = vadd.f32 0.0, %v433
    %435 = vmatmul.bf16.gmra.mxu0 %v291
    %v436 = vpop.f32.mrf.mxu0
    %v437 = vadd.f32 0.0, %v436
    %v438 = vpop.f32.mrf.mxu0
    %v439 = vadd.f32 0.0, %v438
    %440 = vmatmul.bf16.gmra.mxu0 %v292
    %v441 = vpop.f32.mrf.mxu0
    %v442 = vadd.f32 0.0, %v441
    %v443 = vpop.f32.mrf.mxu0
    %v444 = vadd.f32 0.0, %v443
    %445 = vmatmul.bf16.gmra.mxu0 %v293
    %v446 = vpop.f32.mrf.mxu0
    %v447 = vadd.f32 0.0, %v446
    %v448 = vpop.f32.mrf.mxu0
    %v449 = vadd.f32 0.0, %v448
    %450 = vmatmul.bf16.gmra.mxu0 %v294
    %v451 = vpop.f32.mrf.mxu0
    %v452 = vadd.f32 0.0, %v451
    %v453 = vpop.f32.mrf.mxu0
    %v454 = vadd.f32 0.0, %v453
    %455 = vmatmul.bf16.gmra.mxu0 %v295
    %v456 = vpop.f32.mrf.mxu0
    %v457 = vadd.f32 0.0, %v456
    %v458 = vpop.f32.mrf.mxu0
    %v459 = vadd.f32 0.0, %v458
    %460 = vmatmul.bf16.gmra.mxu0 %v296
    %v461 = vpop.f32.mrf.mxu0
    %v462 = vadd.f32 0.0, %v461
    %v463 = vpop.f32.mrf.mxu0
    %v464 = vadd.f32 0.0, %v463
    %465 = vmatmul.bf16.gmra.mxu0 %v297
    %v466 = vpop.f32.mrf.mxu0
    %v467 = vadd.f32 0.0, %v466
    %v468 = vpop.f32.mrf.mxu0
    %v469 = vadd.f32 0.0, %v468
    %470 = vmatmul.bf16.gmra.mxu0 %v298
    %v471 = vpop.f32.mrf.mxu0
    %v472 = vadd.f32 0.0, %v471
    %v473 = vpop.f32.mrf.mxu0
    %v474 = vadd.f32 0.0, %v473
    %475 = vmatmul.bf16.gmra.mxu0 %v299
    %v476 = vpop.f32.mrf.mxu0
    %v477 = vadd.f32 0.0, %v476
    %v478 = vpop.f32.mrf.mxu0
    %v479 = vadd.f32 0.0, %v478
    %480 = vmatmul.bf16.gmra.mxu0 %v300
    %v481 = vpop.f32.mrf.mxu0
    %v482 = vadd.f32 0.0, %v481
    %v483 = vpop.f32.mrf.mxu0
    %v484 = vadd.f32 0.0, %v483
    %485 = vmatmul.bf16.gmra.mxu0 %v301
    %v486 = vpop.f32.mrf.mxu0
    %v487 = vadd.f32 0.0, %v486
    %v488 = vpop.f32.mrf.mxu0
    %v489 = vadd.f32 0.0, %v488
    %490 = vmatmul.bf16.gmra.mxu0 %v302
    %v491 = vpop.f32.mrf.mxu0
    %v492 = vadd.f32 0.0, %v491
    %v493 = vpop.f32.mrf.mxu0
    %v494 = vadd.f32 0.0, %v493
    %495 = vmatmul.bf16.gmra.mxu0 %v303
    %v496 = vpop.f32.mrf.mxu0
    %v497 = vadd.f32 0.0, %v496
    %v498 = vpop.f32.mrf.mxu0
    %v499 = vadd.f32 0.0, %v498
    %500 = vmatmul.bf16.gmra.mxu0 %v304
    %v501 = vpop.f32.mrf.mxu0
    %v502 = vadd.f32 0.0, %v501
    %v503 = vpop.f32.mrf.mxu0
    %v504 = vadd.f32 0.0, %v503
    %505 = vmatmul.bf16.gmra.mxu0 %v305
    %v506 = vpop.f32.mrf.mxu0
    %v507 = vadd.f32 0.0, %v506
    %v508 = vpop.f32.mrf.mxu0
    %v509 = vadd.f32 0.0, %v508
    %510 = vmatmul.bf16.gmra.mxu0 %v306
    %v511 = vpop.f32.mrf.mxu0
    %v512 = vadd.f32 0.0, %v511
    %v513 = vpop.f32.mrf.mxu0
    %v514 = vadd.f32 0.0, %v513
    %515 = vmatmul.bf16.gmra.mxu0 %v307
    %v516 = vpop.f32.mrf.mxu0
    %v517 = vadd.f32 0.0, %v516
    %v518 = vpop.f32.mrf.mxu0
    %v519 = vadd.f32 0.0, %v518
    %520 = vmatmul.bf16.gmra.mxu0 %v308
    %v521 = vpop.f32.mrf.mxu0
    %v522 = vadd.f32 0.0, %v521
    %v523 = vpop.f32.mrf.mxu0
    %v524 = vadd.f32 0.0, %v523
    %525 = vmatmul.bf16.gmra.mxu0 %v309
    %v526 = vpop.f32.mrf.mxu0
    %v527 = vadd.f32 0.0, %v526
    %v528 = vpop.f32.mrf.mxu0
    %v529 = vadd.f32 0.0, %v528
    %530 = vmatmul.bf16.gmra.mxu0 %v310
    %v531 = vpop.f32.mrf.mxu0
    %v532 = vadd.f32 0.0, %v531
    %v533 = vpop.f32.mrf.mxu0
    %v534 = vadd.f32 0.0, %v533
    %535 = vmatmul.bf16.gmra.mxu0 %v311
    %v536 = vpop.f32.mrf.mxu0
    %v537 = vadd.f32 0.0, %v536
    %v538 = vpop.f32.mrf.mxu0
    %v539 = vadd.f32 0.0, %v538
    %540 = vmatmul.bf16.gmra.mxu0 %v312
    %v541 = vpop.f32.mrf.mxu0
    %v542 = vadd.f32 0.0, %v541
    %v543 = vpop.f32.mrf.mxu0
    %v544 = vadd.f32 0.0, %v543
    %545 = vmatmul.bf16.gmra.mxu0 %v313
    %v546 = vpop.f32.mrf.mxu0
    %v547 = vadd.f32 0.0, %v546
    %v548 = vpop.f32.mrf.mxu0
    %v549 = vadd.f32 0.0, %v548
    %550 = vmatmul.bf16.gmra.mxu0 %v314
    %v551 = vpop.f32.mrf.mxu0
    %v552 = vadd.f32 0.0, %v551
    %v553 = vpop.f32.mrf.mxu0
    %v554 = vadd.f32 0.0, %v553
    %555 = vmatmul.bf16.gmra.mxu0 %v315
    %v556 = vpop.f32.mrf.mxu0
    %v557 = vadd.f32 0.0, %v556
    %v558 = vpop.f32.mrf.mxu0
    %v559 = vadd.f32 0.0, %v558
    %560 = vmatmul.bf16.gmra.mxu0 %v316
    %v561 = vpop.f32.mrf.mxu0
    %v562 = vadd.f32 0.0, %v561
    %v563 = vpop.f32.mrf.mxu0
    %v564 = vadd.f32 0.0, %v563
    %565 = vdwg.mxu0
    %v566 = vld [vmem:[%s2] sm:$0x1]
    %v568 = vperm.slane %v566, 0
    %v570 = vmul.f32 %v407, %v568
    %v571 = vmul.f32 %v409, %v568
    %v572 = vmul.f32 %v412, %v568
    %v573 = vmul.f32 %v414, %v568
    %v574 = vmul.f32 %v417, %v568
    %v575 = vmul.f32 %v419, %v568
    %v576 = vmul.f32 %v422, %v568
    %v577 = vmul.f32 %v424, %v568
    %v578 = vmul.f32 %v427, %v568
    %v579 = vmul.f32 %v429, %v568
    %v580 = vmul.f32 %v432, %v568
    %v581 = vmul.f32 %v434, %v568
    %v582 = vmul.f32 %v437, %v568
    %v583 = vmul.f32 %v439, %v568
    %v584 = vmul.f32 %v442, %v568
    %v585 = vmul.f32 %v444, %v568
    %v586 = vmul.f32 %v447, %v568
    %v587 = vmul.f32 %v449, %v568
    %v588 = vmul.f32 %v452, %v568
    %v589 = vmul.f32 %v454, %v568
    %v590 = vmul.f32 %v457, %v568
    %v591 = vmul.f32 %v459, %v568
    %v592 = vmul.f32 %v462, %v568
    %v593 = vmul.f32 %v464, %v568
    %v594 = vmul.f32 %v467, %v568
    %v595 = vmul.f32 %v469, %v568
    %v596 = vmul.f32 %v472, %v568
    %v597 = vmul.f32 %v474, %v568
    %v598 = vmul.f32 %v477, %v568
    %v599 = vmul.f32 %v479, %v568
    %v600 = vmul.f32 %v482, %v568
    %v601 = vmul.f32 %v484, %v568
    %v602 = vmul.f32 %v487, %v568
    %v603 = vmul.f32 %v489, %v568
    %v604 = vmul.f32 %v492, %v568
    %v605 = vmul.f32 %v494, %v568
    %v606 = vmul.f32 %v497, %v568
    %v607 = vmul.f32 %v499, %v568
    %v608 = vmul.f32 %v502, %v568
    %v609 = vmul.f32 %v504, %v568
    %v610 = vmul.f32 %v507, %v568
    %v611 = vmul.f32 %v509, %v568
    %v612 = vmul.f32 %v512, %v568
    %v613 = vmul.f32 %v514, %v568
    %v614 = vmul.f32 %v517, %v568
    %v615 = vmul.f32 %v519, %v568
    %v616 = vmul.f32 %v522, %v568
    %v617 = vmul.f32 %v524, %v568
    %v618 = vmul.f32 %v527, %v568
    %v619 = vmul.f32 %v529, %v568
    %v620 = vmul.f32 %v532, %v568
    %v621 = vmul.f32 %v534, %v568
    %v622 = vmul.f32 %v537, %v568
    %v623 = vmul.f32 %v539, %v568
    %v624 = vmul.f32 %v542, %v568
    %v625 = vmul.f32 %v544, %v568
    %v626 = vmul.f32 %v547, %v568
    %v627 = vmul.f32 %v549, %v568
    %v628 = vmul.f32 %v552, %v568
    %v629 = vmul.f32 %v554, %v568
    %v630 = vmul.f32 %v557, %v568
    %v631 = vmul.f32 %v559, %v568
    %v632 = vmul.f32 %v562, %v568
    %v633 = vmul.f32 %v564, %v568
    %v634 = vld [vmem:[%s3] sm:$0x1]
    %v636 = vperm.slane %v634, 0
    %v638 = vadd.f32 %v570, %v636
    %v639 = vadd.f32 %v571, %v636
    %v640 = vadd.f32 %v572, %v636
    %v641 = vadd.f32 %v573, %v636
    %v642 = vadd.f32 %v574, %v636
    %v643 = vadd.f32 %v575, %v636
    %v644 = vadd.f32 %v576, %v636
    %v645 = vadd.f32 %v577, %v636
    %v646 = vadd.f32 %v578, %v636
    %v647 = vadd.f32 %v579, %v636
    %v648 = vadd.f32 %v580, %v636
    %v649 = vadd.f32 %v581, %v636
    %v650 = vadd.f32 %v582, %v636
    %v651 = vadd.f32 %v583, %v636
    %v652 = vadd.f32 %v584, %v636
    %v653 = vadd.f32 %v585, %v636
    %v654 = vadd.f32 %v586, %v636
    %v655 = vadd.f32 %v587, %v636
    %v656 = vadd.f32 %v588, %v636
    %v657 = vadd.f32 %v589, %v636
    %v658 = vadd.f32 %v590, %v636
    %v659 = vadd.f32 %v591, %v636
    %v660 = vadd.f32 %v592, %v636
    %v661 = vadd.f32 %v593, %v636
    %v662 = vadd.f32 %v594, %v636
    %v663 = vadd.f32 %v595, %v636
    %v664 = vadd.f32 %v596, %v636
    %v665 = vadd.f32 %v597, %v636
    %v666 = vadd.f32 %v598, %v636
    %v667 = vadd.f32 %v599, %v636
    %v668 = vadd.f32 %v600, %v636
    %v669 = vadd.f32 %v601, %v636
    %v670 = vadd.f32 %v602, %v636
    %v671 = vadd.f32 %v603, %v636
    %v672 = vadd.f32 %v604, %v636
    %v673 = vadd.f32 %v605, %v636
    %v674 = vadd.f32 %v606, %v636
    %v675 = vadd.f32 %v607, %v636
    %v676 = vadd.f32 %v608, %v636
    %v677 = vadd.f32 %v609, %v636
    %v678 = vadd.f32 %v610, %v636
    %v679 = vadd.f32 %v611, %v636
    %v680 = vadd.f32 %v612, %v636
    %v681 = vadd.f32 %v613, %v636
    %v682 = vadd.f32 %v614, %v636
    %v683 = vadd.f32 %v615, %v636
    %v684 = vadd.f32 %v616, %v636
    %v685 = vadd.f32 %v617, %v636
    %v686 = vadd.f32 %v618, %v636
    %v687 = vadd.f32 %v619, %v636
    %v688 = vadd.f32 %v620, %v636
    %v689 = vadd.f32 %v621, %v636
    %v690 = vadd.f32 %v622, %v636
    %v691 = vadd.f32 %v623, %v636
    %v692 = vadd.f32 %v624, %v636
    %v693 = vadd.f32 %v625, %v636
    %v694 = vadd.f32 %v626, %v636
    %v695 = vadd.f32 %v627, %v636
    %v696 = vadd.f32 %v628, %v636
    %v697 = vadd.f32 %v629, %v636
    %v698 = vadd.f32 %v630, %v636
    %v699 = vadd.f32 %v631, %v636
    %v700 = vadd.f32 %v632, %v636
    %v701 = vadd.f32 %v633, %v636
    %v702 = vmax.f32 %v638, 0.0
    %v703 = vmax.f32 %v639, 0.0
    %v704 = vmax.f32 %v640, 0.0
    %v705 = vmax.f32 %v641, 0.0
    %v706 = vmax.f32 %v642, 0.0
    %v707 = vmax.f32 %v643, 0.0
    %v708 = vmax.f32 %v644, 0.0
    %v709 = vmax.f32 %v645, 0.0
    %v710 = vmax.f32 %v646, 0.0
    %v711 = vmax.f32 %v647, 0.0
    %v712 = vmax.f32 %v648, 0.0
    %v713 = vmax.f32 %v649, 0.0
    %v714 = vmax.f32 %v650, 0.0
    %v715 = vmax.f32 %v651, 0.0
    %v716 = vmax.f32 %v652, 0.0
    %v717 = vmax.f32 %v653, 0.0
    %v718 = vmax.f32 %v654, 0.0
    %v719 = vmax.f32 %v655, 0.0
    %v720 = vmax.f32 %v656, 0.0
    %v721 = vmax.f32 %v657, 0.0
    %v722 = vmax.f32 %v658, 0.0
    %v723 = vmax.f32 %v659, 0.0
    %v724 = vmax.f32 %v660, 0.0
    %v725 = vmax.f32 %v661, 0.0
    %v726 = vmax.f32 %v662, 0.0
    %v727 = vmax.f32 %v663, 0.0
    %v728 = vmax.f32 %v664, 0.0
    %v729 = vmax.f32 %v665, 0.0
    %v730 = vmax.f32 %v666, 0.0
    %v731 = vmax.f32 %v667, 0.0
    %v732 = vmax.f32 %v668, 0.0
    %v733 = vmax.f32 %v669, 0.0
    %v734 = vmax.f32 %v670, 0.0
    %v735 = vmax.f32 %v671, 0.0
    %v736 = vmax.f32 %v672, 0.0
    %v737 = vmax.f32 %v673, 0.0
    %v738 = vmax.f32 %v674, 0.0
    %v739 = vmax.f32 %v675, 0.0
    %v740 = vmax.f32 %v676, 0.0
    %v741 = vmax.f32 %v677, 0.0
    %v742 = vmax.f32 %v678, 0.0
    %v743 = vmax.f32 %v679, 0.0
    %v744 = vmax.f32 %v680, 0.0
    %v745 = vmax.f32 %v681, 0.0
    %v746 = vmax.f32 %v682, 0.0
    %v747 = vmax.f32 %v683, 0.0
    %v748 = vmax.f32 %v684, 0.0
    %v749 = vmax.f32 %v685, 0.0
    %v750 = vmax.f32 %v686, 0.0
    %v751 = vmax.f32 %v687, 0.0
    %v752 = vmax.f32 %v688, 0.0
    %v753 = vmax.f32 %v689, 0.0
    %v754 = vmax.f32 %v690, 0.0
    %v755 = vmax.f32 %v691, 0.0
    %v756 = vmax.f32 %v692, 0.0
    %v757 = vmax.f32 %v693, 0.0
    %v758 = vmax.f32 %v694, 0.0
    %v759 = vmax.f32 %v695, 0.0
    %v760 = vmax.f32 %v696, 0.0
    %v761 = vmax.f32 %v697, 0.0
    %v762 = vmax.f32 %v698, 0.0
    %v763 = vmax.f32 %v699, 0.0
    %v764 = vmax.f32 %v700, 0.0
    %v765 = vmax.f32 %v701, 0.0
    %v766 = vpack.c.bf16 %v702, %v702
    %v767 = vpack.c.bf16 %v703, %v703
    %v768 = vpack.c.bf16 %v704, %v704
    %v769 = vpack.c.bf16 %v705, %v705
    %v770 = vpack.c.bf16 %v706, %v706
    %v771 = vpack.c.bf16 %v707, %v707
    %v772 = vpack.c.bf16 %v708, %v708
    %v773 = vpack.c.bf16 %v709, %v709
    %v774 = vpack.c.bf16 %v710, %v710
    %v775 = vpack.c.bf16 %v711, %v711
    %v776 = vpack.c.bf16 %v712, %v712
    %v777 = vpack.c.bf16 %v713, %v713
    %v778 = vpack.c.bf16 %v714, %v714
    %v779 = vpack.c.bf16 %v715, %v715
    %v780 = vpack.c.bf16 %v716, %v716
    %v781 = vpack.c.bf16 %v717, %v717
    %v782 = vpack.c.bf16 %v718, %v718
    %v783 = vpack.c.bf16 %v719, %v719
    %v784 = vpack.c.bf16 %v720, %v720
    %v785 = vpack.c.bf16 %v721, %v721
    %v786 = vpack.c.bf16 %v722, %v722
    %v787 = vpack.c.bf16 %v723, %v723
    %v788 = vpack.c.bf16 %v724, %v724
    %v789 = vpack.c.bf16 %v725, %v725
    %v790 = vpack.c.bf16 %v726, %v726
    %v791 = vpack.c.bf16 %v727, %v727
    %v792 = vpack.c.bf16 %v728, %v728
    %v793 = vpack.c.bf16 %v729, %v729
    %v794 = vpack.c.bf16 %v730, %v730
    %v795 = vpack.c.bf16 %v731, %v731
    %v796 = vpack.c.bf16 %v732, %v732
    %v797 = vpack.c.bf16 %v733, %v733
    %v798 = vpack.c.bf16 %v734, %v734
    %v799 = vpack.c.bf16 %v735, %v735
    %v800 = vpack.c.bf16 %v736, %v736
    %v801 = vpack.c.bf16 %v737, %v737
    %v802 = vpack.c.bf16 %v738, %v738
    %v803 = vpack.c.bf16 %v739, %v739
    %v804 = vpack.c.bf16 %v740, %v740
    %v805 = vpack.c.bf16 %v741, %v741
    %v806 = vpack.c.bf16 %v742, %v742
    %v807 = vpack.c.bf16 %v743, %v743
    %v808 = vpack.c.bf16 %v744, %v744
    %v809 = vpack.c.bf16 %v745, %v745
    %v810 = vpack.c.bf16 %v746, %v746
    %v811 = vpack.c.bf16 %v747, %v747
    %v812 = vpack.c.bf16 %v748, %v748
    %v813 = vpack.c.bf16 %v749, %v749
    %v814 = vpack.c.bf16 %v750, %v750
    %v815 = vpack.c.bf16 %v751, %v751
    %v816 = vpack.c.bf16 %v752, %v752
    %v817 = vpack.c.bf16 %v753, %v753
    %v818 = vpack.c.bf16 %v754, %v754
    %v819 = vpack.c.bf16 %v755, %v755
    %v820 = vpack.c.bf16 %v756, %v756
    %v821 = vpack.c.bf16 %v757, %v757
    %v822 = vpack.c.bf16 %v758, %v758
    %v823 = vpack.c.bf16 %v759, %v759
    %v824 = vpack.c.bf16 %v760, %v760
    %v825 = vpack.c.bf16 %v761, %v761
    %v826 = vpack.c.bf16 %v762, %v762
    %v827 = vpack.c.bf16 %v763, %v763
    %v828 = vpack.c.bf16 %v764, %v764
    %v829 = vpack.c.bf16 %v765, %v765
    %830 = vst [vmem:[#allocation8] sm:$0xf] %v766
    %831 = vst [vmem:[#allocation8 + $0x4] sm:$0xf] %v767
    %832 = vst [vmem:[#allocation8 + $0x8] sm:$0xf] %v768
    %833 = vst [vmem:[#allocation8 + $0xc] sm:$0xf] %v769
    %834 = vst [vmem:[#allocation8 + $0x10] sm:$0xf] %v770
    %835 = vst [vmem:[#allocation8 + $0x14] sm:$0xf] %v771
    %836 = vst [vmem:[#allocation8 + $0x18] sm:$0xf] %v772
    %837 = vst [vmem:[#allocation8 + $0x1c] sm:$0xf] %v773
    %838 = vst [vmem:[#allocation8 + $0x20] sm:$0xf] %v774
    %839 = vst [vmem:[#allocation8 + $0x24] sm:$0xf] %v775
    %840 = vst [vmem:[#allocation8 + $0x28] sm:$0xf] %v776
    %841 = vst [vmem:[#allocation8 + $0x2c] sm:$0xf] %v777
    %842 = vst [vmem:[#allocation8 + $0x30] sm:$0xf] %v778
    %843 = vst [vmem:[#allocation8 + $0x34] sm:$0xf] %v779
    %844 = vst [vmem:[#allocation8 + $0x38] sm:$0xf] %v780
    %845 = vst [vmem:[#allocation8 + $0x3c] sm:$0xf] %v781
    %846 = vst [vmem:[#allocation8 + $0x40] sm:$0xf] %v782
    %847 = vst [vmem:[#allocation8 + $0x44] sm:$0xf] %v783
    %848 = vst [vmem:[#allocation8 + $0x48] sm:$0xf] %v784
    %849 = vst [vmem:[#allocation8 + $0x4c] sm:$0xf] %v785
    %850 = vst [vmem:[#allocation8 + $0x50] sm:$0xf] %v786
    %851 = vst [vmem:[#allocation8 + $0x54] sm:$0xf] %v787
    %852 = vst [vmem:[#allocation8 + $0x58] sm:$0xf] %v788
    %853 = vst [vmem:[#allocation8 + $0x5c] sm:$0xf] %v789
    %854 = vst [vmem:[#allocation8 + $0x60] sm:$0xf] %v790
    %855 = vst [vmem:[#allocation8 + $0x64] sm:$0xf] %v791
    %856 = vst [vmem:[#allocation8 + $0x68] sm:$0xf] %v792
    %857 = vst [vmem:[#allocation8 + $0x6c] sm:$0xf] %v793
    %858 = vst [vmem:[#allocation8 + $0x70] sm:$0xf] %v794
    %859 = vst [vmem:[#allocation8 + $0x74] sm:$0xf] %v795
    %860 = vst [vmem:[#allocation8 + $0x78] sm:$0xf] %v796
    %861 = vst [vmem:[#allocation8 + $0x7c] sm:$0xf] %v797
    %862 = vst [vmem:[#allocation8 + $0x80] sm:$0xf] %v798
    %863 = vst [vmem:[#allocation8 + $0x84] sm:$0xf] %v799
    %864 = vst [vmem:[#allocation8 + $0x88] sm:$0xf] %v800
    %865 = vst [vmem:[#allocation8 + $0x8c] sm:$0xf] %v801
    %866 = vst [vmem:[#allocation8 + $0x90] sm:$0xf] %v802
    %867 = vst [vmem:[#allocation8 + $0x94] sm:$0xf] %v803
    %868 = vst [vmem:[#allocation8 + $0x98] sm:$0xf] %v804
    %869 = vst [vmem:[#allocation8 + $0x9c] sm:$0xf] %v805
    %870 = vst [vmem:[#allocation8 + $0xa0] sm:$0xf] %v806
    %871 = vst [vmem:[#allocation8 + $0xa4] sm:$0xf] %v807
    %872 = vst [vmem:[#allocation8 + $0xa8] sm:$0xf] %v808
    %873 = vst [vmem:[#allocation8 + $0xac] sm:$0xf] %v809
    %874 = vst [vmem:[#allocation8 + $0xb0] sm:$0xf] %v810
    %875 = vst [vmem:[#allocation8 + $0xb4] sm:$0xf] %v811
    %876 = vst [vmem:[#allocation8 + $0xb8] sm:$0xf] %v812
    %877 = vst [vmem:[#allocation8 + $0xbc] sm:$0xf] %v813
    %878 = vst [vmem:[#allocation8 + $0xc0] sm:$0xf] %v814
    %879 = vst [vmem:[#allocation8 + $0xc4] sm:$0xf] %v815
    %880 = vst [vmem:[#allocation8 + $0xc8] sm:$0xf] %v816
    %881 = vst [vmem:[#allocation8 + $0xcc] sm:$0xf] %v817
    %882 = vst [vmem:[#allocation8 + $0xd0] sm:$0xf] %v818
    %883 = vst [vmem:[#allocation8 + $0xd4] sm:$0xf] %v819
    %884 = vst [vmem:[#allocation8 + $0xd8] sm:$0xf] %v820
    %885 = vst [vmem:[#allocation8 + $0xdc] sm:$0xf] %v821
    %886 = vst [vmem:[#allocation8 + $0xe0] sm:$0xf] %v822
    %887 = vst [vmem:[#allocation8 + $0xe4] sm:$0xf] %v823
    %888 = vst [vmem:[#allocation8 + $0xe8] sm:$0xf] %v824
    %889 = vst [vmem:[#allocation8 + $0xec] sm:$0xf] %v825
    %890 = vst [vmem:[#allocation8 + $0xf0] sm:$0xf] %v826
    %891 = vst [vmem:[#allocation8 + $0xf4] sm:$0xf] %v827
    %892 = vst [vmem:[#allocation8 + $0xf8] sm:$0xf] %v828
    %893 = vst [vmem:[#allocation8 + $0xfc] sm:$0xf] %v829
    %v894 = vld [vmem:[#allocation7] sm:$0xf]
    %v895 = vld [vmem:[#allocation7 + $0x4] sm:$0xf]
    %v896 = vld [vmem:[#allocation7 + $0x8] sm:$0xf]
    %v897 = vld [vmem:[#allocation7 + $0xc] sm:$0xf]
    %v898 = vld [vmem:[#allocation7 + $0x10] sm:$0xf]
    %v899 = vld [vmem:[#allocation7 + $0x14] sm:$0xf]
    %v900 = vld [vmem:[#allocation7 + $0x18] sm:$0xf]
    %v901 = vld [vmem:[#allocation7 + $0x1c] sm:$0xf]
    %v902 = vld [vmem:[#allocation7 + $0x20] sm:$0xf]
    %v903 = vld [vmem:[#allocation7 + $0x24] sm:$0xf]
    %v904 = vld [vmem:[#allocation7 + $0x28] sm:$0xf]
    %v905 = vld [vmem:[#allocation7 + $0x2c] sm:$0xf]
    %v906 = vld [vmem:[#allocation7 + $0x30] sm:$0xf]
    %v907 = vld [vmem:[#allocation7 + $0x34] sm:$0xf]
    %v908 = vld [vmem:[#allocation7 + $0x38] sm:$0xf]
    %v909 = vld [vmem:[#allocation7 + $0x3c] sm:$0xf]
    %v926 = vunpack.c.l.b16 %v894
    %v927 = vunpack.c.l.b16 %v895
    %v928 = vunpack.c.l.b16 %v896
    %v929 = vunpack.c.l.b16 %v897
    %v930 = vunpack.c.l.b16 %v898
    %v931 = vunpack.c.l.b16 %v899
    %v932 = vunpack.c.l.b16 %v900
    %v933 = vunpack.c.l.b16 %v901
    %v934 = vunpack.c.l.b16 %v902
    %v935 = vunpack.c.l.b16 %v903
    %v936 = vunpack.c.l.b16 %v904
    %v937 = vunpack.c.l.b16 %v905
    %v938 = vunpack.c.l.b16 %v906
    %v939 = vunpack.c.l.b16 %v907
    %v940 = vunpack.c.l.b16 %v908
    %v941 = vunpack.c.l.b16 %v909
    %v942 = vpack.c.b16 %v927, %v926
    %v943 = vpack.c.b16 %v929, %v928
    %v944 = vpack.c.b16 %v931, %v930
    %v945 = vpack.c.b16 %v933, %v932
    %v946 = vpack.c.b16 %v935, %v934
    %v947 = vpack.c.b16 %v937, %v936
    %v948 = vpack.c.b16 %v939, %v938
    %v949 = vpack.c.b16 %v941, %v940
    %958 = vmatpush.bf16.msra.mxu0 %v949
    %959 = vmatpush.bf16.msra.mxu0 %v948
    %960 = vmatpush.bf16.msra.mxu0 %v947
    %961 = vmatpush.bf16.msra.mxu0 %v946
    %962 = vmatpush.bf16.msra.mxu0 %v945
    %963 = vmatpush.bf16.msra.mxu0 %v944
    %964 = vmatpush.bf16.msra.mxu0 %v943
    %965 = vmatpush.bf16.msra.mxu0 %v942
    %966 = vmatmul.bf16.gmra.mxu0 %v285
    %v967 = vpop.f32.mrf.mxu0
    %v968 = vadd.f32 0.0, %v967
    %v969 = vpop.f32.mrf.mxu0
    %v970 = vadd.f32 0.0, %v969
    %971 = vmatmul.bf16.gmra.mxu0 %v286
    %v972 = vpop.f32.mrf.mxu0
    %v973 = vadd.f32 0.0, %v972
    %v974 = vpop.f32.mrf.mxu0
    %v975 = vadd.f32 0.0, %v974
    %976 = vmatmul.bf16.gmra.mxu0 %v287
    %v977 = vpop.f32.mrf.mxu0
    %v978 = vadd.f32 0.0, %v977
    %v979 = vpop.f32.mrf.mxu0
    %v980 = vadd.f32 0.0, %v979
    %981 = vmatmul.bf16.gmra.mxu0 %v288
    %v982 = vpop.f32.mrf.mxu0
    %v983 = vadd.f32 0.0, %v982
    %v984 = vpop.f32.mrf.mxu0
    %v985 = vadd.f32 0.0, %v984
    %986 = vmatmul.bf16.gmra.mxu0 %v289
    %v987 = vpop.f32.mrf.mxu0
    %v988 = vadd.f32 0.0, %v987
    %v989 = vpop.f32.mrf.mxu0
    %v990 = vadd.f32 0.0, %v989
    %991 = vmatmul.bf16.gmra.mxu0 %v290
    %v992 = vpop.f32.mrf.mxu0
    %v993 = vadd.f32 0.0, %v992
    %v994 = vpop.f32.mrf.mxu0
    %v995 = vadd.f32 0.0, %v994
    %996 = vmatmul.bf16.gmra.mxu0 %v291
    %v997 = vpop.f32.mrf.mxu0
    %v998 = vadd.f32 0.0, %v997
    %v999 = vpop.f32.mrf.mxu0
    %v1000 = vadd.f32 0.0, %v999
    %1001 = vmatmul.bf16.gmra.mxu0 %v292
    %v1002 = vpop.f32.mrf.mxu0
    %v1003 = vadd.f32 0.0, %v1002
    %v1004 = vpop.f32.mrf.mxu0
    %v1005 = vadd.f32 0.0, %v1004
    %1006 = vmatmul.bf16.gmra.mxu0 %v293
    %v1007 = vpop.f32.mrf.mxu0
    %v1008 = vadd.f32 0.0, %v1007
    %v1009 = vpop.f32.mrf.mxu0
    %v1010 = vadd.f32 0.0, %v1009
    %1011 = vmatmul.bf16.gmra.mxu0 %v294
    %v1012 = vpop.f32.mrf.mxu0
    %v1013 = vadd.f32 0.0, %v1012
    %v1014 = vpop.f32.mrf.mxu0
    %v1015 = vadd.f32 0.0, %v1014
    %1016 = vmatmul.bf16.gmra.mxu0 %v295
    %v1017 = vpop.f32.mrf.mxu0
    %v1018 = vadd.f32 0.0, %v1017
    %v1019 = vpop.f32.mrf.mxu0
    %v1020 = vadd.f32 0.0, %v1019
    %1021 = vmatmul.bf16.gmra.mxu0 %v296
    %v1022 = vpop.f32.mrf.mxu0
    %v1023 = vadd.f32 0.0, %v1022
    %v1024 = vpop.f32.mrf.mxu0
    %v1025 = vadd.f32 0.0, %v1024
    %1026 = vmatmul.bf16.gmra.mxu0 %v297
    %v1027 = vpop.f32.mrf.mxu0
    %v1028 = vadd.f32 0.0, %v1027
    %v1029 = vpop.f32.mrf.mxu0
    %v1030 = vadd.f32 0.0, %v1029
    %1031 = vmatmul.bf16.gmra.mxu0 %v298
    %v1032 = vpop.f32.mrf.mxu0
    %v1033 = vadd.f32 0.0, %v1032
    %v1034 = vpop.f32.mrf.mxu0
    %v1035 = vadd.f32 0.0, %v1034
    %1036 = vmatmul.bf16.gmra.mxu0 %v299
    %v1037 = vpop.f32.mrf.mxu0
    %v1038 = vadd.f32 0.0, %v1037
    %v1039 = vpop.f32.mrf.mxu0
    %v1040 = vadd.f32 0.0, %v1039
    %1041 = vmatmul.bf16.gmra.mxu0 %v300
    %v1042 = vpop.f32.mrf.mxu0
    %v1043 = vadd.f32 0.0, %v1042
    %v1044 = vpop.f32.mrf.mxu0
    %v1045 = vadd.f32 0.0, %v1044
    %1046 = vmatmul.bf16.gmra.mxu0 %v301
    %v1047 = vpop.f32.mrf.mxu0
    %v1048 = vadd.f32 0.0, %v1047
    %v1049 = vpop.f32.mrf.mxu0
    %v1050 = vadd.f32 0.0, %v1049
    %1051 = vmatmul.bf16.gmra.mxu0 %v302
    %v1052 = vpop.f32.mrf.mxu0
    %v1053 = vadd.f32 0.0, %v1052
    %v1054 = vpop.f32.mrf.mxu0
    %v1055 = vadd.f32 0.0, %v1054
    %1056 = vmatmul.bf16.gmra.mxu0 %v303
    %v1057 = vpop.f32.mrf.mxu0
    %v1058 = vadd.f32 0.0, %v1057
    %v1059 = vpop.f32.mrf.mxu0
    %v1060 = vadd.f32 0.0, %v1059
    %1061 = vmatmul.bf16.gmra.mxu0 %v304
    %v1062 = vpop.f32.mrf.mxu0
    %v1063 = vadd.f32 0.0, %v1062
    %v1064 = vpop.f32.mrf.mxu0
    %v1065 = vadd.f32 0.0, %v1064
    %1066 = vmatmul.bf16.gmra.mxu0 %v305
    %v1067 = vpop.f32.mrf.mxu0
    %v1068 = vadd.f32 0.0, %v1067
    %v1069 = vpop.f32.mrf.mxu0
    %v1070 = vadd.f32 0.0, %v1069
    %1071 = vmatmul.bf16.gmra.mxu0 %v306
    %v1072 = vpop.f32.mrf.mxu0
    %v1073 = vadd.f32 0.0, %v1072
    %v1074 = vpop.f32.mrf.mxu0
    %v1075 = vadd.f32 0.0, %v1074
    %1076 = vmatmul.bf16.gmra.mxu0 %v307
    %v1077 = vpop.f32.mrf.mxu0
    %v1078 = vadd.f32 0.0, %v1077
    %v1079 = vpop.f32.mrf.mxu0
    %v1080 = vadd.f32 0.0, %v1079
    %1081 = vmatmul.bf16.gmra.mxu0 %v308
    %v1082 = vpop.f32.mrf.mxu0
    %v1083 = vadd.f32 0.0, %v1082
    %v1084 = vpop.f32.mrf.mxu0
    %v1085 = vadd.f32 0.0, %v1084
    %1086 = vmatmul.bf16.gmra.mxu0 %v309
    %v1087 = vpop.f32.mrf.mxu0
    %v1088 = vadd.f32 0.0, %v1087
    %v1089 = vpop.f32.mrf.mxu0
    %v1090 = vadd.f32 0.0, %v1089
    %1091 = vmatmul.bf16.gmra.mxu0 %v310
    %v1092 = vpop.f32.mrf.mxu0
    %v1093 = vadd.f32 0.0, %v1092
    %v1094 = vpop.f32.mrf.mxu0
    %v1095 = vadd.f32 0.0, %v1094
    %1096 = vmatmul.bf16.gmra.mxu0 %v311
    %v1097 = vpop.f32.mrf.mxu0
    %v1098 = vadd.f32 0.0, %v1097
    %v1099 = vpop.f32.mrf.mxu0
    %v1100 = vadd.f32 0.0, %v1099
    %1101 = vmatmul.bf16.gmra.mxu0 %v312
    %v1102 = vpop.f32.mrf.mxu0
    %v1103 = vadd.f32 0.0, %v1102
    %v1104 = vpop.f32.mrf.mxu0
    %v1105 = vadd.f32 0.0, %v1104
    %1106 = vmatmul.bf16.gmra.mxu0 %v313
    %v1107 = vpop.f32.mrf.mxu0
    %v1108 = vadd.f32 0.0, %v1107
    %v1109 = vpop.f32.mrf.mxu0
    %v1110 = vadd.f32 0.0, %v1109
    %1111 = vmatmul.bf16.gmra.mxu0 %v314
    %v1112 = vpop.f32.mrf.mxu0
    %v1113 = vadd.f32 0.0, %v1112
    %v1114 = vpop.f32.mrf.mxu0
    %v1115 = vadd.f32 0.0, %v1114
    %1116 = vmatmul.bf16.gmra.mxu0 %v315
    %v1117 = vpop.f32.mrf.mxu0
    %v1118 = vadd.f32 0.0, %v1117
    %v1119 = vpop.f32.mrf.mxu0
    %v1120 = vadd.f32 0.0, %v1119
    %1121 = vmatmul.bf16.gmra.mxu0 %v316
    %v1122 = vpop.f32.mrf.mxu0
    %v1123 = vadd.f32 0.0, %v1122
    %v1124 = vpop.f32.mrf.mxu0
    %v1125 = vadd.f32 0.0, %v1124
    %1126 = vdwg.mxu0
    %v1127 = vld [vmem:[%s5] sm:$0x1]
    %v1129 = vperm.slane %v1127, 0
    %v1131 = vmul.f32 %v968, %v1129
    %v1132 = vmul.f32 %v970, %v1129
    %v1133 = vmul.f32 %v973, %v1129
    %v1134 = vmul.f32 %v975, %v1129
    %v1135 = vmul.f32 %v978, %v1129
    %v1136 = vmul.f32 %v980, %v1129
    %v1137 = vmul.f32 %v983, %v1129
    %v1138 = vmul.f32 %v985, %v1129
    %v1139 = vmul.f32 %v988, %v1129
    %v1140 = vmul.f32 %v990, %v1129
    %v1141 = vmul.f32 %v993, %v1129
    %v1142 = vmul.f32 %v995, %v1129
    %v1143 = vmul.f32 %v998, %v1129
    %v1144 = vmul.f32 %v1000, %v1129
    %v1145 = vmul.f32 %v1003, %v1129
    %v1146 = vmul.f32 %v1005, %v1129
    %v1147 = vmul.f32 %v1008, %v1129
    %v1148 = vmul.f32 %v1010, %v1129
    %v1149 = vmul.f32 %v1013, %v1129
    %v1150 = vmul.f32 %v1015, %v1129
    %v1151 = vmul.f32 %v1018, %v1129
    %v1152 = vmul.f32 %v1020, %v1129
    %v1153 = vmul.f32 %v1023, %v1129
    %v1154 = vmul.f32 %v1025, %v1129
    %v1155 = vmul.f32 %v1028, %v1129
    %v1156 = vmul.f32 %v1030, %v1129
    %v1157 = vmul.f32 %v1033, %v1129
    %v1158 = vmul.f32 %v1035, %v1129
    %v1159 = vmul.f32 %v1038, %v1129
    %v1160 = vmul.f32 %v1040, %v1129
    %v1161 = vmul.f32 %v1043, %v1129
    %v1162 = vmul.f32 %v1045, %v1129
    %v1163 = vmul.f32 %v1048, %v1129
    %v1164 = vmul.f32 %v1050, %v1129
    %v1165 = vmul.f32 %v1053, %v1129
    %v1166 = vmul.f32 %v1055, %v1129
    %v1167 = vmul.f32 %v1058, %v1129
    %v1168 = vmul.f32 %v1060, %v1129
    %v1169 = vmul.f32 %v1063, %v1129
    %v1170 = vmul.f32 %v1065, %v1129
    %v1171 = vmul.f32 %v1068, %v1129
    %v1172 = vmul.f32 %v1070, %v1129
    %v1173 = vmul.f32 %v1073, %v1129
    %v1174 = vmul.f32 %v1075, %v1129
    %v1175 = vmul.f32 %v1078, %v1129
    %v1176 = vmul.f32 %v1080, %v1129
    %v1177 = vmul.f32 %v1083, %v1129
    %v1178 = vmul.f32 %v1085, %v1129
    %v1179 = vmul.f32 %v1088, %v1129
    %v1180 = vmul.f32 %v1090, %v1129
    %v1181 = vmul.f32 %v1093, %v1129
    %v1182 = vmul.f32 %v1095, %v1129
    %v1183 = vmul.f32 %v1098, %v1129
    %v1184 = vmul.f32 %v1100, %v1129
    %v1185 = vmul.f32 %v1103, %v1129
    %v1186 = vmul.f32 %v1105, %v1129
    %v1187 = vmul.f32 %v1108, %v1129
    %v1188 = vmul.f32 %v1110, %v1129
    %v1189 = vmul.f32 %v1113, %v1129
    %v1190 = vmul.f32 %v1115, %v1129
    %v1191 = vmul.f32 %v1118, %v1129
    %v1192 = vmul.f32 %v1120, %v1129
    %v1193 = vmul.f32 %v1123, %v1129
    %v1194 = vmul.f32 %v1125, %v1129
    %v1195 = vld [vmem:[%s6] sm:$0x1]
    %v1197 = vperm.slane %v1195, 0
    %v1199 = vadd.f32 %v1131, %v1197
    %v1200 = vadd.f32 %v1132, %v1197
    %v1201 = vadd.f32 %v1133, %v1197
    %v1202 = vadd.f32 %v1134, %v1197
    %v1203 = vadd.f32 %v1135, %v1197
    %v1204 = vadd.f32 %v1136, %v1197
    %v1205 = vadd.f32 %v1137, %v1197
    %v1206 = vadd.f32 %v1138, %v1197
    %v1207 = vadd.f32 %v1139, %v1197
    %v1208 = vadd.f32 %v1140, %v1197
    %v1209 = vadd.f32 %v1141, %v1197
    %v1210 = vadd.f32 %v1142, %v1197
    %v1211 = vadd.f32 %v1143, %v1197
    %v1212 = vadd.f32 %v1144, %v1197
    %v1213 = vadd.f32 %v1145, %v1197
    %v1214 = vadd.f32 %v1146, %v1197
    %v1215 = vadd.f32 %v1147, %v1197
    %v1216 = vadd.f32 %v1148, %v1197
    %v1217 = vadd.f32 %v1149, %v1197
    %v1218 = vadd.f32 %v1150, %v1197
    %v1219 = vadd.f32 %v1151, %v1197
    %v1220 = vadd.f32 %v1152, %v1197
    %v1221 = vadd.f32 %v1153, %v1197
    %v1222 = vadd.f32 %v1154, %v1197
    %v1223 = vadd.f32 %v1155, %v1197
    %v1224 = vadd.f32 %v1156, %v1197
    %v1225 = vadd.f32 %v1157, %v1197
    %v1226 = vadd.f32 %v1158, %v1197
    %v1227 = vadd.f32 %v1159, %v1197
    %v1228 = vadd.f32 %v1160, %v1197
    %v1229 = vadd.f32 %v1161, %v1197
    %v1230 = vadd.f32 %v1162, %v1197
    %v1231 = vadd.f32 %v1163, %v1197
    %v1232 = vadd.f32 %v1164, %v1197
    %v1233 = vadd.f32 %v1165, %v1197
    %v1234 = vadd.f32 %v1166, %v1197
    %v1235 = vadd.f32 %v1167, %v1197
    %v1236 = vadd.f32 %v1168, %v1197
    %v1237 = vadd.f32 %v1169, %v1197
    %v1238 = vadd.f32 %v1170, %v1197
    %v1239 = vadd.f32 %v1171, %v1197
    %v1240 = vadd.f32 %v1172, %v1197
    %v1241 = vadd.f32 %v1173, %v1197
    %v1242 = vadd.f32 %v1174, %v1197
    %v1243 = vadd.f32 %v1175, %v1197
    %v1244 = vadd.f32 %v1176, %v1197
    %v1245 = vadd.f32 %v1177, %v1197
    %v1246 = vadd.f32 %v1178, %v1197
    %v1247 = vadd.f32 %v1179, %v1197
    %v1248 = vadd.f32 %v1180, %v1197
    %v1249 = vadd.f32 %v1181, %v1197
    %v1250 = vadd.f32 %v1182, %v1197
    %v1251 = vadd.f32 %v1183, %v1197
    %v1252 = vadd.f32 %v1184, %v1197
    %v1253 = vadd.f32 %v1185, %v1197
    %v1254 = vadd.f32 %v1186, %v1197
    %v1255 = vadd.f32 %v1187, %v1197
    %v1256 = vadd.f32 %v1188, %v1197
    %v1257 = vadd.f32 %v1189, %v1197
    %v1258 = vadd.f32 %v1190, %v1197
    %v1259 = vadd.f32 %v1191, %v1197
    %v1260 = vadd.f32 %v1192, %v1197
    %v1261 = vadd.f32 %v1193, %v1197
    %v1262 = vadd.f32 %v1194, %v1197
    %v1263 = vpack.c.bf16 %v1199, %v1199
    %v1264 = vpack.c.bf16 %v1200, %v1200
    %v1265 = vpack.c.bf16 %v1201, %v1201
    %v1266 = vpack.c.bf16 %v1202, %v1202
    %v1267 = vpack.c.bf16 %v1203, %v1203
    %v1268 = vpack.c.bf16 %v1204, %v1204
    %v1269 = vpack.c.bf16 %v1205, %v1205
    %v1270 = vpack.c.bf16 %v1206, %v1206
    %v1271 = vpack.c.bf16 %v1207, %v1207
    %v1272 = vpack.c.bf16 %v1208, %v1208
    %v1273 = vpack.c.bf16 %v1209, %v1209
    %v1274 = vpack.c.bf16 %v1210, %v1210
    %v1275 = vpack.c.bf16 %v1211, %v1211
    %v1276 = vpack.c.bf16 %v1212, %v1212
    %v1277 = vpack.c.bf16 %v1213, %v1213
    %v1278 = vpack.c.bf16 %v1214, %v1214
    %v1279 = vpack.c.bf16 %v1215, %v1215
    %v1280 = vpack.c.bf16 %v1216, %v1216
    %v1281 = vpack.c.bf16 %v1217, %v1217
    %v1282 = vpack.c.bf16 %v1218, %v1218
    %v1283 = vpack.c.bf16 %v1219, %v1219
    %v1284 = vpack.c.bf16 %v1220, %v1220
    %v1285 = vpack.c.bf16 %v1221, %v1221
    %v1286 = vpack.c.bf16 %v1222, %v1222
    %v1287 = vpack.c.bf16 %v1223, %v1223
    %v1288 = vpack.c.bf16 %v1224, %v1224
    %v1289 = vpack.c.bf16 %v1225, %v1225
    %v1290 = vpack.c.bf16 %v1226, %v1226
    %v1291 = vpack.c.bf16 %v1227, %v1227
    %v1292 = vpack.c.bf16 %v1228, %v1228
    %v1293 = vpack.c.bf16 %v1229, %v1229
    %v1294 = vpack.c.bf16 %v1230, %v1230
    %v1295 = vpack.c.bf16 %v1231, %v1231
    %v1296 = vpack.c.bf16 %v1232, %v1232
    %v1297 = vpack.c.bf16 %v1233, %v1233
    %v1298 = vpack.c.bf16 %v1234, %v1234
    %v1299 = vpack.c.bf16 %v1235, %v1235
    %v1300 = vpack.c.bf16 %v1236, %v1236
    %v1301 = vpack.c.bf16 %v1237, %v1237
    %v1302 = vpack.c.bf16 %v1238, %v1238
    %v1303 = vpack.c.bf16 %v1239, %v1239
    %v1304 = vpack.c.bf16 %v1240, %v1240
    %v1305 = vpack.c.bf16 %v1241, %v1241
    %v1306 = vpack.c.bf16 %v1242, %v1242
    %v1307 = vpack.c.bf16 %v1243, %v1243
    %v1308 = vpack.c.bf16 %v1244, %v1244
    %v1309 = vpack.c.bf16 %v1245, %v1245
    %v1310 = vpack.c.bf16 %v1246, %v1246
    %v1311 = vpack.c.bf16 %v1247, %v1247
    %v1312 = vpack.c.bf16 %v1248, %v1248
    %v1313 = vpack.c.bf16 %v1249, %v1249
    %v1314 = vpack.c.bf16 %v1250, %v1250
    %v1315 = vpack.c.bf16 %v1251, %v1251
    %v1316 = vpack.c.bf16 %v1252, %v1252
    %v1317 = vpack.c.bf16 %v1253, %v1253
    %v1318 = vpack.c.bf16 %v1254, %v1254
    %v1319 = vpack.c.bf16 %v1255, %v1255
    %v1320 = vpack.c.bf16 %v1256, %v1256
    %v1321 = vpack.c.bf16 %v1257, %v1257
    %v1322 = vpack.c.bf16 %v1258, %v1258
    %v1323 = vpack.c.bf16 %v1259, %v1259
    %v1324 = vpack.c.bf16 %v1260, %v1260
    %v1325 = vpack.c.bf16 %v1261, %v1261
    %v1326 = vpack.c.bf16 %v1262, %v1262
    %1327 = vst [vmem:[#allocation9] sm:$0xf] %v1263
    %1328 = vst [vmem:[#allocation9 + $0x4] sm:$0xf] %v1264
    %1329 = vst [vmem:[#allocation9 + $0x8] sm:$0xf] %v1265
    %1330 = vst [vmem:[#allocation9 + $0xc] sm:$0xf] %v1266
    %1331 = vst [vmem:[#allocation9 + $0x10] sm:$0xf] %v1267
    %1332 = vst [vmem:[#allocation9 + $0x14] sm:$0xf] %v1268
    %1333 = vst [vmem:[#allocation9 + $0x18] sm:$0xf] %v1269
    %1334 = vst [vmem:[#allocation9 + $0x1c] sm:$0xf] %v1270
    %1335 = vst [vmem:[#allocation9 + $0x20] sm:$0xf] %v1271
    %1336 = vst [vmem:[#allocation9 + $0x24] sm:$0xf] %v1272
    %1337 = vst [vmem:[#allocation9 + $0x28] sm:$0xf] %v1273
    %1338 = vst [vmem:[#allocation9 + $0x2c] sm:$0xf] %v1274
    %1339 = vst [vmem:[#allocation9 + $0x30] sm:$0xf] %v1275
    %1340 = vst [vmem:[#allocation9 + $0x34] sm:$0xf] %v1276
    %1341 = vst [vmem:[#allocation9 + $0x38] sm:$0xf] %v1277
    %1342 = vst [vmem:[#allocation9 + $0x3c] sm:$0xf] %v1278
    %1343 = vst [vmem:[#allocation9 + $0x40] sm:$0xf] %v1279
    %1344 = vst [vmem:[#allocation9 + $0x44] sm:$0xf] %v1280
    %1345 = vst [vmem:[#allocation9 + $0x48] sm:$0xf] %v1281
    %1346 = vst [vmem:[#allocation9 + $0x4c] sm:$0xf] %v1282
    %1347 = vst [vmem:[#allocation9 + $0x50] sm:$0xf] %v1283
    %1348 = vst [vmem:[#allocation9 + $0x54] sm:$0xf] %v1284
    %1349 = vst [vmem:[#allocation9 + $0x58] sm:$0xf] %v1285
    %1350 = vst [vmem:[#allocation9 + $0x5c] sm:$0xf] %v1286
    %1351 = vst [vmem:[#allocation9 + $0x60] sm:$0xf] %v1287
    %1352 = vst [vmem:[#allocation9 + $0x64] sm:$0xf] %v1288
    %1353 = vst [vmem:[#allocation9 + $0x68] sm:$0xf] %v1289
    %1354 = vst [vmem:[#allocation9 + $0x6c] sm:$0xf] %v1290
    %1355 = vst [vmem:[#allocation9 + $0x70] sm:$0xf] %v1291
    %1356 = vst [vmem:[#allocation9 + $0x74] sm:$0xf] %v1292
    %1357 = vst [vmem:[#allocation9 + $0x78] sm:$0xf] %v1293
    %1358 = vst [vmem:[#allocation9 + $0x7c] sm:$0xf] %v1294
    %1359 = vst [vmem:[#allocation9 + $0x80] sm:$0xf] %v1295
    %1360 = vst [vmem:[#allocation9 + $0x84] sm:$0xf] %v1296
    %1361 = vst [vmem:[#allocation9 + $0x88] sm:$0xf] %v1297
    %1362 = vst [vmem:[#allocation9 + $0x8c] sm:$0xf] %v1298
    %1363 = vst [vmem:[#allocation9 + $0x90] sm:$0xf] %v1299
    %1364 = vst [vmem:[#allocation9 + $0x94] sm:$0xf] %v1300
    %1365 = vst [vmem:[#allocation9 + $0x98] sm:$0xf] %v1301
    %1366 = vst [vmem:[#allocation9 + $0x9c] sm:$0xf] %v1302
    %1367 = vst [vmem:[#allocation9 + $0xa0] sm:$0xf] %v1303
    %1368 = vst [vmem:[#allocation9 + $0xa4] sm:$0xf] %v1304
    %1369 = vst [vmem:[#allocation9 + $0xa8] sm:$0xf] %v1305
    %1370 = vst [vmem:[#allocation9 + $0xac] sm:$0xf] %v1306
    %1371 = vst [vmem:[#allocation9 + $0xb0] sm:$0xf] %v1307
    %1372 = vst [vmem:[#allocation9 + $0xb4] sm:$0xf] %v1308
    %1373 = vst [vmem:[#allocation9 + $0xb8] sm:$0xf] %v1309
    %1374 = vst [vmem:[#allocation9 + $0xbc] sm:$0xf] %v1310
    %1375 = vst [vmem:[#allocation9 + $0xc0] sm:$0xf] %v1311
    %1376 = vst [vmem:[#allocation9 + $0xc4] sm:$0xf] %v1312
    %1377 = vst [vmem:[#allocation9 + $0xc8] sm:$0xf] %v1313
    %1378 = vst [vmem:[#allocation9 + $0xcc] sm:$0xf] %v1314
    %1379 = vst [vmem:[#allocation9 + $0xd0] sm:$0xf] %v1315
    %1380 = vst [vmem:[#allocation9 + $0xd4] sm:$0xf] %v1316
    %1381 = vst [vmem:[#allocation9 + $0xd8] sm:$0xf] %v1317
    %1382 = vst [vmem:[#allocation9 + $0xdc] sm:$0xf] %v1318
    %1383 = vst [vmem:[#allocation9 + $0xe0] sm:$0xf] %v1319
    %1384 = vst [vmem:[#allocation9 + $0xe4] sm:$0xf] %v1320
    %1385 = vst [vmem:[#allocation9 + $0xe8] sm:$0xf] %v1321
    %1386 = vst [vmem:[#allocation9 + $0xec] sm:$0xf] %v1322
    %1387 = vst [vmem:[#allocation9 + $0xf0] sm:$0xf] %v1323
    %1388 = vst [vmem:[#allocation9 + $0xf4] sm:$0xf] %v1324
    %1389 = vst [vmem:[#allocation9 + $0xf8] sm:$0xf] %v1325
    %1390 = vst [vmem:[#allocation9 + $0xfc] sm:$0xf] %v1326
    // Predicated region
    $region42: #{tpu_custom_call.1} parent=1 // pred_check
      _
    $region43: #{tpu_custom_call.1} parent=1 // pred_check_branch
      %1392 = sbr.rel (0) target = $region45
    $region44: #{tpu_custom_call.1} parent=1 // pred_region
      %1394 = vsyncadd [#allocation4], 0
      %s1395 = sshll.u32 [#allocation8], 4
      %s1396 = int_to_ptr.vmem [resolvable:$true] %s1395
      %s1397 = sshll.u32 %s7, 4
      %s1398 = int_to_ptr.hbm [resolvable:$true] %s1397
      %1403 = dma.vmem_to_hbm [thread:$0]  %s1396, 4096, %s1398, [#allocation4], 64, 64, 4
    $region45: #{tpu_custom_call.1} parent=1 // pred_fallthru
      _
    // Predicated region
    $region46: #{tpu_custom_call.1} parent=1 // pred_check
      _
    $region47: #{tpu_custom_call.1} parent=1 // pred_check_branch
      %1405 = sbr.rel (0) target = $region49
    $region48: #{tpu_custom_call.1} parent=1 // pred_region
      %1407 = vsyncadd [#allocation10], 0
      %s1408 = sshll.u32 [#allocation9], 4
      %s1409 = int_to_ptr.vmem [resolvable:$true] %s1408
      %s1410 = sshll.u32 %s8, 4
      %s1411 = int_to_ptr.hbm [resolvable:$true] %s1410
      %1416 = dma.vmem_to_hbm [thread:$0]  %s1409, 4096, %s1411, [#allocation10], 64, 64, 4
    $region49: #{tpu_custom_call.1} parent=1 // pred_fallthru
      _
    // Predicated region
    $region50: #{tpu_custom_call.1} parent=1 // pred_check
      _
    $region51: #{tpu_custom_call.1} parent=1 // pred_check_branch
      %1418 = sbr.rel (0) target = $region53
    $region52: #{tpu_custom_call.1} parent=1 // pred_region
      %1420 = dma.done [#allocation4], 4096
    $region53: #{tpu_custom_call.1} parent=1 // pred_fallthru
      _
    // Predicated region
    $region54: #{tpu_custom_call.1} parent=1 // pred_check
      _
    $region55: #{tpu_custom_call.1} parent=1 // pred_check_branch
      %1422 = sbr.rel (0) target = $region57
    $region56: #{tpu_custom_call.1} parent=1 // pred_region
      %1424 = dma.done [#allocation10], 4096
    $region57: #{tpu_custom_call.1} parent=1 // pred_fallthru
      _
    %1425 = vsyncpa [#allocation3], 1
    %1426 = vsyncpa [#allocation6], 1
    %1427 = vsyncpa [#allocation4], 1
    %1428 = vsyncpa [#allocation10], 1

</llo_original>
